<compile_context>
chip_gen: v7x
topology: tpu7x:2x2x1
jax: 0.10.0
libtpu: 0.0.40
codegen_flags: <defaults>
</compile_context>

<pallas_src>
import functools

import jax
import jax.numpy as jnp
import numpy as np
from jax.experimental import pallas as pl
from jax.experimental.pallas import tpu as pltpu

BN_EPS = 1e-5
TILE_N = 128     # node tile (A row/col tile); 128-aligned for all generations
LANE = 128       # lane width for feature / class padding
SUBLANE = 8


def _round_up(x, m):
    return (x + m - 1) // m * m


def _pad2d(a, rows, cols):
    return jnp.pad(a, ((0, rows - a.shape[0]), (0, cols - a.shape[1])))


# ----------------------------- kernels --------------------------------------

def gcn_layer_kernel(a_ref, h_ref, w_ref, b_ref, o_ref, acc_ref, *, apply_relu):
    """acc[i] += A[i,k] @ H[k]; at last k: O[i] = act(acc[i] @ W + b)."""
    k = pl.program_id(1)

    @pl.when(k == 0)
    def _():
        acc_ref[...] = jnp.zeros_like(acc_ref)

    acc_ref[...] += jnp.dot(a_ref[...], h_ref[...],
                            preferred_element_type=jnp.float32)

    @pl.when(k == pl.num_programs(1) - 1)
    def _():
        y = jnp.dot(acc_ref[...].astype(w_ref.dtype), w_ref[...],
                    preferred_element_type=jnp.float32) + b_ref[...]
        if apply_relu:
            y = jnp.maximum(y, 0.0)
        o_ref[...] = y.astype(o_ref.dtype)


def pool_linear_kernel(p_ref, h_ref, wl_ref, bl_ref, o_ref, acc_ref):
    """acc += P[:,k] @ H[k]; at last k: out = acc @ WL + bL (dropout=id, eval)."""
    k = pl.program_id(0)

    @pl.when(k == 0)
    def _():
        acc_ref[...] = jnp.zeros_like(acc_ref)

    acc_ref[...] += jnp.dot(p_ref[...], h_ref[...],
                            preferred_element_type=jnp.float32)

    @pl.when(k == pl.num_programs(0) - 1)
    def _():
        o_ref[...] = (jnp.dot(acc_ref[...].astype(wl_ref.dtype), wl_ref[...],
                              preferred_element_type=jnp.float32)
                      + bl_ref[...]).astype(o_ref.dtype)


# ----------------------------- wrappers --------------------------------------

def gcn_layer(a, h, w, b, *, apply_relu):
    n_pad, f_pad = h.shape
    f_out = w.shape[1]
    n_row = n_pad // TILE_N
    n_col = n_pad // TILE_N
    flops = 2 * n_pad * n_pad * f_pad + 2 * n_pad * f_pad * f_out
    bytes_acc = (a.size * a.dtype.itemsize + h.size * h.dtype.itemsize
                 + w.size * w.dtype.itemsize + n_pad * f_out * 2)
    return pl.pallas_call(
        functools.partial(gcn_layer_kernel, apply_relu=apply_relu),
        out_shape=jax.ShapeDtypeStruct((n_pad, f_out), jnp.bfloat16),
        grid_spec=pltpu.PrefetchScalarGridSpec(
            num_scalar_prefetch=0,
            grid=(n_row, n_col),                                    # reduction last
            in_specs=[
                pl.BlockSpec((TILE_N, TILE_N), lambda i, k: (i, k)),  # A tile
                pl.BlockSpec((TILE_N, f_pad), lambda i, k: (k, 0)),   # H tile
                pl.BlockSpec((f_pad, f_out), lambda i, k: (0, 0)),    # W
                pl.BlockSpec((1, f_out), lambda i, k: (0, 0)),        # b
            ],
            out_specs=pl.BlockSpec((TILE_N, f_out), lambda i, k: (i, 0)),
            scratch_shapes=[pltpu.VMEM((TILE_N, f_pad), jnp.float32)],
        ),
        compiler_params=pltpu.CompilerParams(
            dimension_semantics=("parallel", "arbitrary")),
        cost_estimate=pl.CostEstimate(flops=flops, transcendentals=0,
                                      bytes_accessed=bytes_acc),
    )(a, h, w, b)


def pool_linear(p, h, wl, bl):
    g_pad = p.shape[0]
    n_pad, f_pad = h.shape
    c_pad = wl.shape[1]
    n_col = n_pad // TILE_N
    flops = 2 * g_pad * n_pad * f_pad + 2 * g_pad * f_pad * c_pad
    bytes_acc = (p.size * p.dtype.itemsize + h.size * h.dtype.itemsize
                 + wl.size * wl.dtype.itemsize + g_pad * c_pad * 4)
    return pl.pallas_call(
        pool_linear_kernel,
        out_shape=jax.ShapeDtypeStruct((g_pad, c_pad), jnp.float32),
        grid_spec=pltpu.PrefetchScalarGridSpec(
            num_scalar_prefetch=0,
            grid=(n_col,),
            in_specs=[
                pl.BlockSpec((g_pad, TILE_N), lambda k: (0, k)),   # pool tile
                pl.BlockSpec((TILE_N, f_pad), lambda k: (k, 0)),   # H tile
                pl.BlockSpec((f_pad, c_pad), lambda k: (0, 0)),    # WL
                pl.BlockSpec((1, c_pad), lambda k: (0, 0)),        # bL
            ],
            out_specs=pl.BlockSpec((g_pad, c_pad), lambda k: (0, 0)),
            scratch_shapes=[pltpu.VMEM((g_pad, f_pad), jnp.float32)],
        ),
        compiler_params=pltpu.CompilerParams(
            dimension_semantics=("arbitrary",)),
        cost_estimate=pl.CostEstimate(flops=flops, transcendentals=0,
                                      bytes_accessed=bytes_acc),
    )(p, h, wl, bl)


def gcn2_forward(x, a_norm, pool, params):
    """Padded/tiled Pallas GCN2 forward. Returns (num_graphs, num_classes) f32."""
    n, f_in = x.shape
    g = pool.shape[0]
    hidden = params["w1"].shape[1]
    n_classes = params["wl"].shape[1]

    n_pad = _round_up(n, TILE_N)
    f_pad = _round_up(max(f_in, hidden), LANE)
    c_pad = _round_up(n_classes, LANE)
    g_pad = _round_up(g, SUBLANE)

    # Fold eval-mode BatchNorm1d into conv1's weight/bias (bit-exact in eval).
    scale = params["bn_g"] * jax.lax.rsqrt(params["bn_v"] + BN_EPS)   # (1, f_in)
    shift = params["bn_b"] - params["bn_m"] * scale                   # (1, f_in)
    w1_f = params["w1"] * scale.reshape(-1, 1)                        # (f_in, hidden)
    b1_f = params["b1"] + shift @ params["w1"]                        # (1, hidden)

    bf16 = jnp.bfloat16
    a_p = _pad2d(a_norm, n_pad, n_pad).astype(bf16)
    x_p = _pad2d(x, n_pad, f_pad).astype(bf16)
    p_p = _pad2d(pool, g_pad, n_pad).astype(bf16)

    w1_p = _pad2d(w1_f, f_pad, f_pad).astype(bf16)
    w2_p = _pad2d(params["w2"], f_pad, f_pad).astype(bf16)
    w3_p = _pad2d(params["w3"], f_pad, f_pad).astype(bf16)
    wl_p = _pad2d(params["wl"], f_pad, c_pad).astype(bf16)
    b1_p = _pad2d(b1_f, 1, f_pad)
    b2_p = _pad2d(params["b2"], 1, f_pad)
    b3_p = _pad2d(params["b3"], 1, f_pad)
    bl_p = _pad2d(params["bl"], 1, c_pad)

    h = gcn_layer(a_p, x_p, w1_p, b1_p, apply_relu=True)   # (A@X)@W1 reorder
    h = gcn_layer(a_p, h, w2_p, b2_p, apply_relu=True)
    h = gcn_layer(a_p, h, w3_p, b3_p, apply_relu=False)
    out = pool_linear(p_p, h, wl_p, bl_p)
    return out[:g, :n_classes]


# ----------------------------- references ------------------------------------

def reference_forward_f32(x, a_norm, pool, p):
    """Pure f32 reference matching the PyTorch module (eval mode)."""
    h = (x - p["bn_m"]) * jax.lax.rsqrt(p["bn_v"] + BN_EPS) * p["bn_g"] + p["bn_b"]
    h = jnp.maximum(a_norm @ (h @ p["w1"]) + p["b1"], 0.0)
    h = jnp.maximum(a_norm @ (h @ p["w2"]) + p["b2"], 0.0)
    h = a_norm @ (h @ p["w3"]) + p["b3"]
    g = pool @ h
    return g @ p["wl"] + p["bl"]


def reference_forward_bf16(x, a_norm, pool, p):
    """Reference using the kernels' bf16-operand / f32-accumulate recipe."""
    bf16 = jnp.bfloat16
    scale = p["bn_g"] * jax.lax.rsqrt(p["bn_v"] + BN_EPS)
    shift = p["bn_b"] - p["bn_m"] * scale
    w1_f = (p["w1"] * scale.reshape(-1, 1)).astype(bf16)
    b1_f = p["b1"] + shift @ p["w1"]

    def layer(a, h, w, b, relu):
        ah = jnp.dot(a, h, preferred_element_type=jnp.float32)
        y = jnp.dot(ah.astype(bf16), w, preferred_element_type=jnp.float32) + b
        if relu:
            y = jnp.maximum(y, 0.0)
        return y.astype(bf16)

    a = a_norm.astype(bf16)
    h = layer(a, x.astype(bf16), w1_f, b1_f, True)
    h = layer(a, h, p["w2"].astype(bf16), p["b2"], True)
    h = layer(a, h, p["w3"].astype(bf16), p["b3"], False)
    ph = jnp.dot(pool.astype(bf16), h, preferred_element_type=jnp.float32)
    return jnp.dot(ph.astype(bf16), p["wl"].astype(bf16),
                   preferred_element_type=jnp.float32) + p["bl"]


# ----------------------------- graph setup ------------------------------------

def build_graph(num_graphs, nodes_per_graph):
    """Disjoint undirected ring graphs; returns (edge_index, batch)."""
    src, dst = [], []
    for g in range(num_graphs):
        base = g * nodes_per_graph
        for i in range(nodes_per_graph):
            a = base + i
            b = base + (i + 1) % nodes_per_graph
            src += [a, b]
            dst += [b, a]
    edge_index = np.array([src, dst], dtype=np.int32)
    batch = np.repeat(np.arange(num_graphs, dtype=np.int32), nodes_per_graph)
    return jnp.asarray(edge_index), jnp.asarray(batch)


def build_a_norm(edge_index, num_nodes):
    """Dense symmetric-normalized adjacency with self-loops (GCNConv norm)."""
    src, dst = edge_index[0], edge_index[1]
    A = jnp.zeros((num_nodes, num_nodes), jnp.float32).at[dst, src].add(1.0)
    A = A + jnp.eye(num_nodes, dtype=jnp.float32)
    deg = A.sum(axis=1)
    dinv = jax.lax.rsqrt(deg)
    return dinv[:, None] * A * dinv[None, :]


def build_pool(batch, num_graphs):
    onehot = (batch[None, :] == jnp.arange(num_graphs)[:, None]).astype(jnp.float32)
    counts = onehot.sum(axis=1, keepdims=True)
    return onehot / counts


def init_params(key, f_in, hidden, num_classes):
    ks = jax.random.split(key, 10)
    s = 0.1
    return {
        "bn_g": jax.random.normal(ks[0], (1, f_in)) * s + 1.0,
        "bn_b": jax.random.normal(ks[1], (1, f_in)) * s,
        "bn_m": jax.random.normal(ks[2], (1, f_in)) * s,
        "bn_v": jnp.abs(jax.random.normal(ks[3], (1, f_in))) * s + 1.0,
        "w1": jax.random.normal(ks[4], (f_in, hidden)) * s,
        "b1": jnp.zeros((1, hidden), jnp.float32),
        "w2": jax.random.normal(ks[5], (hidden, hidden)) * s,
        "b2": jnp.zeros((1, hidden), jnp.float32),
        "w3": jax.random.normal(ks[6], (hidden, hidden)) * s,
        "b3": jnp.zeros((1, hidden), jnp.float32),
        "wl": jax.random.normal(ks[7], (hidden, num_classes)) * s,
        "bl": jax.random.normal(ks[8], (1, num_classes)) * s,
    }


if __name__ == "__main__":
    NUM_GRAPHS = 2
    NODES_PER_GRAPH = 96               # N=192 -> padded to 256 -> 2x2 node-tile grid
    N = NUM_GRAPHS * NODES_PER_GRAPH
    F_IN = 8                           # dataset.num_node_features
    HIDDEN = 32                        # hidden_channels
    NUM_CLASSES = 4                    # dataset.num_classes

    key = jax.random.PRNGKey(0)
    kx, kp = jax.random.split(key)

    x = jax.random.normal(kx, (N, F_IN), dtype=jnp.float32)
    edge_index, batch = build_graph(NUM_GRAPHS, NODES_PER_GRAPH)
    a_norm = build_a_norm(edge_index, N)
    pool = build_pool(batch, NUM_GRAPHS)
    params = init_params(kp, F_IN, HIDDEN, NUM_CLASSES)
    params = jax.tree_util.tree_map(lambda a: a.astype(jnp.float32), params)

    fwd = jax.jit(gcn2_forward)
    out = jax.block_until_ready(fwd(x, a_norm, pool, params))

    # Tight check against a reference that uses the same bf16/f32 recipe.
    ref_bf16 = jax.block_until_ready(reference_forward_bf16(x, a_norm, pool, params))
    np.testing.assert_allclose(np.asarray(out), np.asarray(ref_bf16),
                               rtol=1e-2, atol=1e-3)

    # Loose check against the pure-f32 module semantics (bf16 MXU operands).
    ref_f32 = jax.block_until_ready(reference_forward_f32(x, a_norm, pool, params))
    np.testing.assert_allclose(np.asarray(out), np.asarray(ref_f32),
                               rtol=5e-2, atol=5e-2)

    print("KERNEL_OK")
</pallas_src>

<mosaic_0001>
module attributes {stable_mosaic.version = 11 : i64} {
  func.func @gcn_layer_kernel(%arg0: i32, %arg1: i32, %arg2: memref<128x128xbf16, #tpu.memory_space<vmem>>, %arg3: memref<128x128xbf16, #tpu.memory_space<vmem>>, %arg4: memref<128x128xbf16, #tpu.memory_space<vmem>>, %arg5: memref<1x128xf32, #tpu.memory_space<vmem>>, %arg6: memref<128x128xbf16, #tpu.memory_space<vmem>>, %arg7: memref<128x128xf32, #tpu.memory_space<vmem>>) attributes {dimension_semantics = [#tpu.dimension_semantics<parallel>, #tpu.dimension_semantics<arbitrary>], iteration_bounds = array<i64: 2, 2>, scalar_prefetch = 0 : i64, scratch_operands = 1 : i64, tpu.core_type = #tpu.core_type<tc>, window_params = [{transform_indices = @transform_0, window_bounds = array<i64: 128, 128>}, {transform_indices = @transform_1, window_bounds = array<i64: 128, 128>}, {pipeline_mode = #tpu.pipeline_mode<synchronous>, transform_indices = @transform_2, window_bounds = array<i64: 128, 128>}, {pipeline_mode = #tpu.pipeline_mode<synchronous>, transform_indices = @transform_3, window_bounds = array<i64: 1, 128>}, {transform_indices = @transform_4, window_bounds = array<i64: 128, 128>}]} {
    %c0_i32 = arith.constant 0 : i32
    %0 = arith.cmpi eq, %arg1, %c0_i32 : i32
    %1 = arith.extui %0 : i1 to i32
    %c0_i32_0 = arith.constant 0 : i32
    %2 = arith.cmpi ne, %1, %c0_i32_0 : i32
    scf.if %2 {
      %cst_9 = arith.constant 0.000000e+00 : f32
      %12 = vector.broadcast %cst_9 : f32 to vector<128x128xf32>
      %c0_10 = arith.constant 0 : index
      %c0_11 = arith.constant 0 : index
      %13 = vector.load %arg7[%c0_10, %c0_11] : memref<128x128xf32, #tpu.memory_space<vmem>>, vector<128x128xf32>
      tpu.vector_store %arg7[%c0_10, %c0_11], %12 {strides = array<i32>} : memref<128x128xf32, #tpu.memory_space<vmem>>, vector<128x128xf32>,
    } else {
    }
    %c0 = arith.constant 0 : index
    %c0_1 = arith.constant 0 : index
    %3 = vector.load %arg7[%c0, %c0_1] : memref<128x128xf32, #tpu.memory_space<vmem>>, vector<128x128xf32>
    %c0_2 = arith.constant 0 : index
    %c0_3 = arith.constant 0 : index
    %4 = vector.load %arg2[%c0_2, %c0_3] : memref<128x128xbf16, #tpu.memory_space<vmem>>, vector<128x128xbf16>
    %c0_4 = arith.constant 0 : index
    %c0_5 = arith.constant 0 : index
    %5 = vector.load %arg3[%c0_4, %c0_5] : memref<128x128xbf16, #tpu.memory_space<vmem>>, vector<128x128xbf16>
    %cst = arith.constant dense<0.000000e+00> : vector<128x128xf32>
    %6 = tpu.matmul %4, %5, %cst {dimension_numbers = #tpu.dot_dimension_numbers<[1], [0], [0], [1], [0, 0, 1, 1], [], []>} : vector<128x128xbf16>, vector<128x128xbf16>, vector<128x128xf32> -> vector<128x128xf32>
    %7 = arith.addf %3, %6 : vector<128x128xf32>
    %c0_6 = arith.constant 0 : index
    %c0_7 = arith.constant 0 : index
    %8 = vector.load %arg7[%c0_6, %c0_7] : memref<128x128xf32, #tpu.memory_space<vmem>>, vector<128x128xf32>
    tpu.vector_store %arg7[%c0_6, %c0_7], %7 {strides = array<i32>} : memref<128x128xf32, #tpu.memory_space<vmem>>, vector<128x128xf32>,
    %c1_i32 = arith.constant 1 : i32
    %9 = arith.cmpi eq, %arg1, %c1_i32 : i32
    %10 = arith.extui %9 : i1 to i32
    %c0_i32_8 = arith.constant 0 : i32
    %11 = arith.cmpi ne, %10, %c0_i32_8 : i32
    scf.if %11 {
      %c0_9 = arith.constant 0 : index
      %c0_10 = arith.constant 0 : index
      %12 = vector.load %arg7[%c0_9, %c0_10] : memref<128x128xf32, #tpu.memory_space<vmem>>, vector<128x128xf32>
      %13 = arith.truncf %12 : vector<128x128xf32> to vector<128x128xbf16>
      %c0_11 = arith.constant 0 : index
      %c0_12 = arith.constant 0 : index
      %14 = vector.load %arg4[%c0_11, %c0_12] : memref<128x128xbf16, #tpu.memory_space<vmem>>, vector<128x128xbf16>
      %cst_13 = arith.constant dense<0.000000e+00> : vector<128x128xf32>
      %15 = tpu.matmul %13, %14, %cst_13 {dimension_numbers = #tpu.dot_dimension_numbers<[1], [0], [0], [1], [0, 0, 1, 1], [], []>} : vector<128x128xbf16>, vector<128x128xbf16>, vector<128x128xf32> -> vector<128x128xf32>
      %c0_14 = arith.constant 0 : index
      %c0_15 = arith.constant 0 : index
      %16 = vector.load %arg5[%c0_14, %c0_15] : memref<1x128xf32, #tpu.memory_space<vmem>>, vector<1x128xf32>
      %17 = vector.broadcast %16 : vector<1x128xf32> to vector<128x128xf32>
      %18 = arith.addf %15, %17 : vector<128x128xf32>
      %cst_16 = arith.constant 0.000000e+00 : f32
      %19 = vector.broadcast %cst_16 : f32 to vector<128x128xf32>
      %20 = arith.maximumf %18, %19 : vector<128x128xf32>
      %21 = arith.truncf %20 : vector<128x128xf32> to vector<128x128xbf16>
      %c0_17 = arith.constant 0 : index
      %c0_18 = arith.constant 0 : index
      %22 = vector.load %arg6[%c0_17, %c0_18] : memref<128x128xbf16, #tpu.memory_space<vmem>>, vector<128x128xbf16>
      tpu.vector_store %arg6[%c0_17, %c0_18], %21 {strides = array<i32>} : memref<128x128xbf16, #tpu.memory_space<vmem>>, vector<128x128xbf16>,
    } else {
    }
    return
  }
  func.func @transform_0(%arg0: i32, %arg1: i32) -> (i32, i32) {
    %c0_i32 = arith.constant 0 : i32
    return %arg0, %arg1 : i32, i32
  }
  func.func @transform_1(%arg0: i32, %arg1: i32) -> (i32, i32) {
    %c0_i32 = arith.constant 0 : i32
    %c0_i32_0 = arith.constant 0 : i32
    return %arg1, %c0_i32 : i32, i32
  }
  func.func @transform_2(%arg0: i32, %arg1: i32) -> (i32, i32) {
    %c0_i32 = arith.constant 0 : i32
    %c0_i32_0 = arith.constant 0 : i32
    %c0_i32_1 = arith.constant 0 : i32
    return %c0_i32, %c0_i32_0 : i32, i32
  }
  func.func @transform_3(%arg0: i32, %arg1: i32) -> (i32, i32) {
    %c0_i32 = arith.constant 0 : i32
    %c0_i32_0 = arith.constant 0 : i32
    %c0_i32_1 = arith.constant 0 : i32
    return %c0_i32, %c0_i32_0 : i32, i32
  }
  func.func @transform_4(%arg0: i32, %arg1: i32) -> (i32, i32) {
    %c0_i32 = arith.constant 0 : i32
    %c0_i32_0 = arith.constant 0 : i32
    return %arg0, %c0_i32 : i32, i32
  }
}

module attributes {stable_mosaic.version = 11 : i64} {
  func.func @gcn_layer_kernel(%arg0: i32, %arg1: i32, %arg2: memref<128x128xbf16, #tpu.memory_space<vmem>>, %arg3: memref<128x128xbf16, #tpu.memory_space<vmem>>, %arg4: memref<128x128xbf16, #tpu.memory_space<vmem>>, %arg5: memref<1x128xf32, #tpu.memory_space<vmem>>, %arg6: memref<128x128xbf16, #tpu.memory_space<vmem>>, %arg7: memref<128x128xf32, #tpu.memory_space<vmem>>) attributes {dimension_semantics = [#tpu.dimension_semantics<parallel>, #tpu.dimension_semantics<arbitrary>], iteration_bounds = array<i64: 2, 2>, scalar_prefetch = 0 : i64, scratch_operands = 1 : i64, tpu.core_type = #tpu.core_type<tc>, window_params = [{transform_indices = @transform_0, window_bounds = array<i64: 128, 128>}, {transform_indices = @transform_1, window_bounds = array<i64: 128, 128>}, {pipeline_mode = #tpu.pipeline_mode<synchronous>, transform_indices = @transform_2, window_bounds = array<i64: 128, 128>}, {pipeline_mode = #tpu.pipeline_mode<synchronous>, transform_indices = @transform_3, window_bounds = array<i64: 1, 128>}, {transform_indices = @transform_4, window_bounds = array<i64: 128, 128>}]} {
    %c0_i32 = arith.constant 0 : i32
    %0 = arith.cmpi eq, %arg1, %c0_i32 : i32
    %1 = arith.extui %0 : i1 to i32
    %c0_i32_0 = arith.constant 0 : i32
    %2 = arith.cmpi ne, %1, %c0_i32_0 : i32
    scf.if %2 {
      %cst_9 = arith.constant 0.000000e+00 : f32
      %12 = vector.broadcast %cst_9 : f32 to vector<128x128xf32>
      %c0_10 = arith.constant 0 : index
      %c0_11 = arith.constant 0 : index
      %13 = vector.load %arg7[%c0_10, %c0_11] : memref<128x128xf32, #tpu.memory_space<vmem>>, vector<128x128xf32>
      tpu.vector_store %arg7[%c0_10, %c0_11], %12 {strides = array<i32>} : memref<128x128xf32, #tpu.memory_space<vmem>>, vector<128x128xf32>,
    } else {
    }
    %c0 = arith.constant 0 : index
    %c0_1 = arith.constant 0 : index
    %3 = vector.load %arg7[%c0, %c0_1] : memref<128x128xf32, #tpu.memory_space<vmem>>, vector<128x128xf32>
    %c0_2 = arith.constant 0 : index
    %c0_3 = arith.constant 0 : index
    %4 = vector.load %arg2[%c0_2, %c0_3] : memref<128x128xbf16, #tpu.memory_space<vmem>>, vector<128x128xbf16>
    %c0_4 = arith.constant 0 : index
    %c0_5 = arith.constant 0 : index
    %5 = vector.load %arg3[%c0_4, %c0_5] : memref<128x128xbf16, #tpu.memory_space<vmem>>, vector<128x128xbf16>
    %cst = arith.constant dense<0.000000e+00> : vector<128x128xf32>
    %6 = tpu.matmul %4, %5, %cst {dimension_numbers = #tpu.dot_dimension_numbers<[1], [0], [0], [1], [0, 0, 1, 1], [], []>} : vector<128x128xbf16>, vector<128x128xbf16>, vector<128x128xf32> -> vector<128x128xf32>
    %7 = arith.addf %3, %6 : vector<128x128xf32>
    %c0_6 = arith.constant 0 : index
    %c0_7 = arith.constant 0 : index
    %8 = vector.load %arg7[%c0_6, %c0_7] : memref<128x128xf32, #tpu.memory_space<vmem>>, vector<128x128xf32>
    tpu.vector_store %arg7[%c0_6, %c0_7], %7 {strides = array<i32>} : memref<128x128xf32, #tpu.memory_space<vmem>>, vector<128x128xf32>,
    %c1_i32 = arith.constant 1 : i32
    %9 = arith.cmpi eq, %arg1, %c1_i32 : i32
    %10 = arith.extui %9 : i1 to i32
    %c0_i32_8 = arith.constant 0 : i32
    %11 = arith.cmpi ne, %10, %c0_i32_8 : i32
    scf.if %11 {
      %c0_9 = arith.constant 0 : index
      %c0_10 = arith.constant 0 : index
      %12 = vector.load %arg7[%c0_9, %c0_10] : memref<128x128xf32, #tpu.memory_space<vmem>>, vector<128x128xf32>
      %13 = arith.truncf %12 : vector<128x128xf32> to vector<128x128xbf16>
      %c0_11 = arith.constant 0 : index
      %c0_12 = arith.constant 0 : index
      %14 = vector.load %arg4[%c0_11, %c0_12] : memref<128x128xbf16, #tpu.memory_space<vmem>>, vector<128x128xbf16>
      %cst_13 = arith.constant dense<0.000000e+00> : vector<128x128xf32>
      %15 = tpu.matmul %13, %14, %cst_13 {dimension_numbers = #tpu.dot_dimension_numbers<[1], [0], [0], [1], [0, 0, 1, 1], [], []>} : vector<128x128xbf16>, vector<128x128xbf16>, vector<128x128xf32> -> vector<128x128xf32>
      %c0_14 = arith.constant 0 : index
      %c0_15 = arith.constant 0 : index
      %16 = vector.load %arg5[%c0_14, %c0_15] : memref<1x128xf32, #tpu.memory_space<vmem>>, vector<1x128xf32>
      %17 = vector.broadcast %16 : vector<1x128xf32> to vector<128x128xf32>
      %18 = arith.addf %15, %17 : vector<128x128xf32>
      %19 = arith.truncf %18 : vector<128x128xf32> to vector<128x128xbf16>
      %c0_16 = arith.constant 0 : index
      %c0_17 = arith.constant 0 : index
      %20 = vector.load %arg6[%c0_16, %c0_17] : memref<128x128xbf16, #tpu.memory_space<vmem>>, vector<128x128xbf16>
      tpu.vector_store %arg6[%c0_16, %c0_17], %19 {strides = array<i32>} : memref<128x128xbf16, #tpu.memory_space<vmem>>, vector<128x128xbf16>,
    } else {
    }
    return
  }
  func.func @transform_0(%arg0: i32, %arg1: i32) -> (i32, i32) {
    %c0_i32 = arith.constant 0 : i32
    return %arg0, %arg1 : i32, i32
  }
  func.func @transform_1(%arg0: i32, %arg1: i32) -> (i32, i32) {
    %c0_i32 = arith.constant 0 : i32
    %c0_i32_0 = arith.constant 0 : i32
    return %arg1, %c0_i32 : i32, i32
  }
  func.func @transform_2(%arg0: i32, %arg1: i32) -> (i32, i32) {
    %c0_i32 = arith.constant 0 : i32
    %c0_i32_0 = arith.constant 0 : i32
    %c0_i32_1 = arith.constant 0 : i32
    return %c0_i32, %c0_i32_0 : i32, i32
  }
  func.func @transform_3(%arg0: i32, %arg1: i32) -> (i32, i32) {
    %c0_i32 = arith.constant 0 : i32
    %c0_i32_0 = arith.constant 0 : i32
    %c0_i32_1 = arith.constant 0 : i32
    return %c0_i32, %c0_i32_0 : i32, i32
  }
  func.func @transform_4(%arg0: i32, %arg1: i32) -> (i32, i32) {
    %c0_i32 = arith.constant 0 : i32
    %c0_i32_0 = arith.constant 0 : i32
    return %arg0, %c0_i32 : i32, i32
  }
}

module attributes {stable_mosaic.version = 11 : i64} {
  func.func @pool_linear_kernel(%arg0: i32, %arg1: memref<8x128xbf16, #tpu.memory_space<vmem>>, %arg2: memref<128x128xbf16, #tpu.memory_space<vmem>>, %arg3: memref<128x128xbf16, #tpu.memory_space<vmem>>, %arg4: memref<1x128xf32, #tpu.memory_space<vmem>>, %arg5: memref<8x128xf32, #tpu.memory_space<vmem>>, %arg6: memref<8x128xf32, #tpu.memory_space<vmem>>) attributes {dimension_semantics = [#tpu.dimension_semantics<arbitrary>], iteration_bounds = array<i64: 2>, scalar_prefetch = 0 : i64, scratch_operands = 1 : i64, tpu.core_type = #tpu.core_type<tc>, window_params = [{transform_indices = @transform_0, window_bounds = array<i64: 8, 128>}, {transform_indices = @transform_1, window_bounds = array<i64: 128, 128>}, {pipeline_mode = #tpu.pipeline_mode<synchronous>, transform_indices = @transform_2, window_bounds = array<i64: 128, 128>}, {pipeline_mode = #tpu.pipeline_mode<synchronous>, transform_indices = @transform_3, window_bounds = array<i64: 1, 128>}, {pipeline_mode = #tpu.pipeline_mode<synchronous>, transform_indices = @transform_4, window_bounds = array<i64: 8, 128>}]} {
    %c0_i32 = arith.constant 0 : i32
    %0 = arith.cmpi eq, %arg0, %c0_i32 : i32
    %1 = arith.extui %0 : i1 to i32
    %c0_i32_0 = arith.constant 0 : i32
    %2 = arith.cmpi ne, %1, %c0_i32_0 : i32
    scf.if %2 {
      %cst_9 = arith.constant 0.000000e+00 : f32
      %12 = vector.broadcast %cst_9 : f32 to vector<8x128xf32>
      %c0_10 = arith.constant 0 : index
      %c0_11 = arith.constant 0 : index
      %13 = vector.load %arg6[%c0_10, %c0_11] : memref<8x128xf32, #tpu.memory_space<vmem>>, vector<8x128xf32>
      tpu.vector_store %arg6[%c0_10, %c0_11], %12 {strides = array<i32>} : memref<8x128xf32, #tpu.memory_space<vmem>>, vector<8x128xf32>,
    } else {
    }
    %c0 = arith.constant 0 : index
    %c0_1 = arith.constant 0 : index
    %3 = vector.load %arg6[%c0, %c0_1] : memref<8x128xf32, #tpu.memory_space<vmem>>, vector<8x128xf32>
    %c0_2 = arith.constant 0 : index
    %c0_3 = arith.constant 0 : index
    %4 = vector.load %arg1[%c0_2, %c0_3] : memref<8x128xbf16, #tpu.memory_space<vmem>>, vector<8x128xbf16>
    %c0_4 = arith.constant 0 : index
    %c0_5 = arith.constant 0 : index
    %5 = vector.load %arg2[%c0_4, %c0_5] : memref<128x128xbf16, #tpu.memory_space<vmem>>, vector<128x128xbf16>
    %cst = arith.constant dense<0.000000e+00> : vector<8x128xf32>
    %6 = tpu.matmul %4, %5, %cst {dimension_numbers = #tpu.dot_dimension_numbers<[1], [0], [0], [1], [0, 0, 1, 1], [], []>} : vector<8x128xbf16>, vector<128x128xbf16>, vector<8x128xf32> -> vector<8x128xf32>
    %7 = arith.addf %3, %6 : vector<8x128xf32>
    %c0_6 = arith.constant 0 : index
    %c0_7 = arith.constant 0 : index
    %8 = vector.load %arg6[%c0_6, %c0_7] : memref<8x128xf32, #tpu.memory_space<vmem>>, vector<8x128xf32>
    tpu.vector_store %arg6[%c0_6, %c0_7], %7 {strides = array<i32>} : memref<8x128xf32, #tpu.memory_space<vmem>>, vector<8x128xf32>,
    %c1_i32 = arith.constant 1 : i32
    %9 = arith.cmpi eq, %arg0, %c1_i32 : i32
    %10 = arith.extui %9 : i1 to i32
    %c0_i32_8 = arith.constant 0 : i32
    %11 = arith.cmpi ne, %10, %c0_i32_8 : i32
    scf.if %11 {
      %c0_9 = arith.constant 0 : index
      %c0_10 = arith.constant 0 : index
      %12 = vector.load %arg6[%c0_9, %c0_10] : memref<8x128xf32, #tpu.memory_space<vmem>>, vector<8x128xf32>
      %13 = arith.truncf %12 : vector<8x128xf32> to vector<8x128xbf16>
      %c0_11 = arith.constant 0 : index
      %c0_12 = arith.constant 0 : index
      %14 = vector.load %arg3[%c0_11, %c0_12] : memref<128x128xbf16, #tpu.memory_space<vmem>>, vector<128x128xbf16>
      %cst_13 = arith.constant dense<0.000000e+00> : vector<8x128xf32>
      %15 = tpu.matmul %13, %14, %cst_13 {dimension_numbers = #tpu.dot_dimension_numbers<[1], [0], [0], [1], [0, 0, 1, 1], [], []>} : vector<8x128xbf16>, vector<128x128xbf16>, vector<8x128xf32> -> vector<8x128xf32>
      %c0_14 = arith.constant 0 : index
      %c0_15 = arith.constant 0 : index
      %16 = vector.load %arg4[%c0_14, %c0_15] : memref<1x128xf32, #tpu.memory_space<vmem>>, vector<1x128xf32>
      %17 = vector.broadcast %16 : vector<1x128xf32> to vector<8x128xf32>
      %18 = arith.addf %15, %17 : vector<8x128xf32>
      %c0_16 = arith.constant 0 : index
      %c0_17 = arith.constant 0 : index
      %19 = vector.load %arg5[%c0_16, %c0_17] : memref<8x128xf32, #tpu.memory_space<vmem>>, vector<8x128xf32>
      tpu.vector_store %arg5[%c0_16, %c0_17], %18 {strides = array<i32>} : memref<8x128xf32, #tpu.memory_space<vmem>>, vector<8x128xf32>,
    } else {
    }
    return
  }
  func.func @transform_0(%arg0: i32) -> (i32, i32) {
    %c0_i32 = arith.constant 0 : i32
    %c0_i32_0 = arith.constant 0 : i32
    return %c0_i32, %arg0 : i32, i32
  }
  func.func @transform_1(%arg0: i32) -> (i32, i32) {
    %c0_i32 = arith.constant 0 : i32
    %c0_i32_0 = arith.constant 0 : i32
    return %arg0, %c0_i32 : i32, i32
  }
  func.func @transform_2(%arg0: i32) -> (i32, i32) {
    %c0_i32 = arith.constant 0 : i32
    %c0_i32_0 = arith.constant 0 : i32
    %c0_i32_1 = arith.constant 0 : i32
    return %c0_i32, %c0_i32_0 : i32, i32
  }
  func.func @transform_3(%arg0: i32) -> (i32, i32) {
    %c0_i32 = arith.constant 0 : i32
    %c0_i32_0 = arith.constant 0 : i32
    %c0_i32_1 = arith.constant 0 : i32
    return %c0_i32, %c0_i32_0 : i32, i32
  }
  func.func @transform_4(%arg0: i32) -> (i32, i32) {
    %c0_i32 = arith.constant 0 : i32
    %c0_i32_0 = arith.constant 0 : i32
    %c0_i32_1 = arith.constant 0 : i32
    return %c0_i32, %c0_i32_0 : i32, i32
  }
}

</mosaic_0001>

<llo_original>
// kernel: gcn2_forward.7
$region0: #{gcn2_forward.7}
  #allocation0 [shape = 'u32[]', space=smem, size = 0x4, offset = 0x4, fixed_abs, tag = 'smem constant byte address 0x4 - core index']
  #allocation1 [shape = 'u32[144,128]{1,0:T(1,128)}', space=vmem, size = 0x12000, scoped, tag = 'internal scratch']
  #allocation2 [shape = 'f32[8,128]{1,0:T(8,128)}', space=vmem, size = 0x1000, scoped, tag = 'scratch operand']
  %s0 = inlined_call_operand.vmem [shape: bf16[8,256], index: 0, kind: input, shape index: {}]
  %s1 = inlined_call_operand.vmem [shape: bf16[256,128], index: 1, kind: input, shape index: {}]
  %s2 = inlined_call_operand.vmem [shape: bf16[128,128], index: 2, kind: input, shape index: {}]
  %s3 = inlined_call_operand.vmem [shape: f32[1,128], index: 3, kind: input, shape index: {}]
  %s4 = inlined_call_operand.vmem [shape: f32[8,128], index: 4, kind: output, shape index: {}]
  %s5 = sld [smem:[#allocation0]]
  $region57: #{gcn2_forward.7} parent=0
    _
  %s7 = ssub.s32 1, %s5
  %s8 = scalar_select 0, %s7, %s5
  loop: start=0, step=1, limit=4
  $region2: #{gcn2_forward.7} parent=0 // loop_pre_header
    _
  $region3: #{gcn2_forward.7} parent=0 // loop_header
    %s10 = sphi 0, %s14
    %p11 = scmp.ge.s32.totalorder %s10, 4
    %s20 = sphi 0, %s22
    %s23 = sphi 0, %s20
    %s24 = sphi 0, %s23
    %s40 = sphi 0, %s24
    %s46 = sphi 0, %s48
    %s49 = sphi 0, %s46
    %s50 = sphi 0, %s49
    %s66 = sphi 0, %s50
    %s70 = sphi 0, %s70
    %s72 = sphi 0, %s70
    %s73 = sphi 0, %s72
    %s87 = sphi 0, %s73
    %s91 = sphi 0, %s91
    %s93 = sphi 0, %s91
    %s94 = sphi 0, %s93
    %s108 = sphi 0, %s94
    %s112 = sphi 0, %s112
    %s114 = sphi 0, %s112
    %s115 = sphi 0, %s114
    %s129 = sphi 0, %s115
  $region4: #{gcn2_forward.7} parent=0 // loop_header_branch
    %13 = sbr.rel (%p11) target = $region8
  $region5: #{gcn2_forward.7} parent=0 // loop_body
    %s15 = ssub.s32 %s10, 1
    %s16 = ssub.s32 %s10, 2
    %s17 = sadd.s32 %s10, 1
    %s18 = ssub.s32 %s10, %s17
    %p19 = scmp.eq.s32.totalorder %s18, 0
    %s21 = sadd.s32 %s20, 1
    %s22 = scalar_select %p19, %s20, %s21
    %p25 = pneg %p19
    %p26 = scmp.eq.s32.totalorder %s10, 1
    %p27 = por %p25, %p26
    %p28 = scmp.ne.s32.totalorder %s20, %s23
    %p29 = scmp.eq.s32.totalorder %s10, 0
    %p30 = por %p28, %p29
    %p31 = scmp.ne.s32.totalorder %s20, %s23
    %p32 = scmp.eq.s32.totalorder %s15, 1
    %p33 = por %p31, %p32
    %p34 = scmp.ne.s32.totalorder %s23, %s24
    %p35 = scmp.eq.s32.totalorder %s15, 0
    %p36 = por %p34, %p35
    %p37 = scmp.ne.s32.totalorder %s23, %s24
    %p38 = scmp.eq.s32.totalorder %s16, 1
    %p39 = por %p37, %p38
    %p41 = scmp.ne.s32.totalorder %s24, %s40
    %p42 = scmp.eq.s32.totalorder %s16, 0
    %p43 = por %p41, %p42
    %s44 = ssub.s32 %s10, %s17
    %p45 = scmp.eq.s32.totalorder %s44, 0
    %s47 = sadd.s32 %s46, 1
    %s48 = scalar_select %p45, %s46, %s47
    %p51 = pneg %p45
    %p52 = scmp.eq.s32.totalorder %s10, 1
    %p53 = por %p51, %p52
    %p54 = scmp.ne.s32.totalorder %s46, %s49
    %p55 = scmp.eq.s32.totalorder %s10, 0
    %p56 = por %p54, %p55
    %p57 = scmp.ne.s32.totalorder %s46, %s49
    %p58 = scmp.eq.s32.totalorder %s15, 1
    %p59 = por %p57, %p58
    %p60 = scmp.ne.s32.totalorder %s49, %s50
    %p61 = scmp.eq.s32.totalorder %s15, 0
    %p62 = por %p60, %p61
    %p63 = scmp.ne.s32.totalorder %s49, %s50
    %p64 = scmp.eq.s32.totalorder %s16, 1
    %p65 = por %p63, %p64
    %p67 = scmp.ne.s32.totalorder %s50, %s66
    %p68 = scmp.eq.s32.totalorder %s16, 0
    %p69 = por %p67, %p68
    %s71 = sadd.s32 %s70, 1
    %p74 = scmp.eq.s32.totalorder %s10, 1
    %p75 = scmp.ne.s32.totalorder %s70, %s72
    %p76 = scmp.eq.s32.totalorder %s10, 0
    %p77 = por %p75, %p76
    %p78 = scmp.ne.s32.totalorder %s70, %s72
    %p79 = scmp.eq.s32.totalorder %s15, 1
    %p80 = por %p78, %p79
    %p81 = scmp.ne.s32.totalorder %s72, %s73
    %p82 = scmp.eq.s32.totalorder %s15, 0
    %p83 = por %p81, %p82
    %p84 = scmp.ne.s32.totalorder %s72, %s73
    %p85 = scmp.eq.s32.totalorder %s16, 1
    %p86 = por %p84, %p85
    %p88 = scmp.ne.s32.totalorder %s73, %s87
    %p89 = scmp.eq.s32.totalorder %s16, 0
    %p90 = por %p88, %p89
    %s92 = sadd.s32 %s91, 1
    %p95 = scmp.eq.s32.totalorder %s10, 1
    %p96 = scmp.ne.s32.totalorder %s91, %s93
    %p97 = scmp.eq.s32.totalorder %s10, 0
    %p98 = por %p96, %p97
    %p99 = scmp.ne.s32.totalorder %s91, %s93
    %p100 = scmp.eq.s32.totalorder %s15, 1
    %p101 = por %p99, %p100
    %p102 = scmp.ne.s32.totalorder %s93, %s94
    %p103 = scmp.eq.s32.totalorder %s15, 0
    %p104 = por %p102, %p103
    %p105 = scmp.ne.s32.totalorder %s93, %s94
    %p106 = scmp.eq.s32.totalorder %s16, 1
    %p107 = por %p105, %p106
    %p109 = scmp.ne.s32.totalorder %s94, %s108
    %p110 = scmp.eq.s32.totalorder %s16, 0
    %p111 = por %p109, %p110
    %s113 = sadd.s32 %s112, 1
    %p116 = scmp.eq.s32.totalorder %s10, 1
    %p117 = scmp.ne.s32.totalorder %s112, %s114
    %p118 = scmp.eq.s32.totalorder %s10, 0
    %p119 = por %p117, %p118
    %p120 = scmp.ne.s32.totalorder %s112, %s114
    %p121 = scmp.eq.s32.totalorder %s15, 1
    %p122 = por %p120, %p121
    %p123 = scmp.ne.s32.totalorder %s114, %s115
    %p124 = scmp.eq.s32.totalorder %s15, 0
    %p125 = por %p123, %p124
    %p126 = scmp.ne.s32.totalorder %s114, %s115
    %p127 = scmp.eq.s32.totalorder %s16, 1
    %p128 = por %p126, %p127
    %p130 = scmp.ne.s32.totalorder %s115, %s129
    %p131 = scmp.eq.s32.totalorder %s16, 0
    %p132 = por %p130, %p131
    %p133 = scmp.le.s32.totalorder 1, %s10
    %p134 = scmp.lt.s32.totalorder %s10, 3
    %p135 = pnand %p133, %p134
    %p136 = pneg %p135
    // Predicated region
    $region9: #{gcn2_forward.7} parent=5 // pred_check
      _
    $region10: #{gcn2_forward.7} parent=5 // pred_check_branch
      %138 = sbr.rel (%p135) target = $region12
    $region11: #{gcn2_forward.7} parent=5 // pred_region
      %s139 = ssub.s32 %s10, 1
      // Predicated region
      $region13: #{gcn2_forward.7} parent=11 // pred_check
        %p140 = pneg %p83
      $region14: #{gcn2_forward.7} parent=11 // pred_check_branch
        %142 = sbr.rel (%p140) target = $region16
      $region15: #{gcn2_forward.7} parent=11 // pred_region
        _
      $region16: #{gcn2_forward.7} parent=11 // pred_fallthru
        _
      // Predicated region
      $region17: #{gcn2_forward.7} parent=11 // pred_check
        %p143 = pneg %p104
      $region18: #{gcn2_forward.7} parent=11 // pred_check_branch
        %145 = sbr.rel (%p143) target = $region20
      $region19: #{gcn2_forward.7} parent=11 // pred_region
        _
      $region20: #{gcn2_forward.7} parent=11 // pred_fallthru
        _
    $region12: #{gcn2_forward.7} parent=5 // pred_fallthru
      _
    %p146 = scmp.lt.s32.totalorder %s10, 2
    // Predicated region
    $region21: #{gcn2_forward.7} parent=5 // pred_check
      %p147 = pneg %p146
    $region22: #{gcn2_forward.7} parent=5 // pred_check_branch
      %149 = sbr.rel (%p147) target = $region24
    $region23: #{gcn2_forward.7} parent=5 // pred_region
      // Predicated region
      $region25: #{gcn2_forward.7} parent=23 // pred_check
        %p150 = pneg %p30
      $region26: #{gcn2_forward.7} parent=23 // pred_check_branch
        %152 = sbr.rel (%p150) target = $region28
      $region27: #{gcn2_forward.7} parent=23 // pred_region
        %p153 = scmp.lt.s32.totalorder %s10, 1
        %s154 = scalar_select %p153, %s10, 1
        %s155 = smul.addr %s154, 4
        %s156 = scalar_lea.vmem %s0, %s155
      $region28: #{gcn2_forward.7} parent=23 // pred_fallthru
        _
      // Predicated region
      $region29: #{gcn2_forward.7} parent=23 // pred_check
        %p157 = pneg %p56
      $region30: #{gcn2_forward.7} parent=23 // pred_check_branch
        %159 = sbr.rel (%p157) target = $region32
      $region31: #{gcn2_forward.7} parent=23 // pred_region
        %s160 = smul.u32 16, %s10
        %p161 = scmp.lt.s32.totalorder %s160, 31
        %s162 = scalar_select %p161, %s160, 31
        %s163 = smul.addr %s162, 4
        %s164 = scalar_lea.vmem %s1, %s163
        %s165 = smul.u32 16, %s10
      $region32: #{gcn2_forward.7} parent=23 // pred_fallthru
        _
    $region24: #{gcn2_forward.7} parent=5 // pred_fallthru
      _
    %p166 = scmp.le.s32.totalorder 1, %s10
    %p167 = scmp.lt.s32.totalorder %s10, 3
    %p168 = pnand %p166, %p167
    %p169 = pneg %p168
    // Predicated region
    $region33: #{gcn2_forward.7} parent=5 // pred_check
      _
    $region34: #{gcn2_forward.7} parent=5 // pred_check_branch
      %171 = sbr.rel (%p168) target = $region36
    $region35: #{gcn2_forward.7} parent=5 // pred_region
      %s172 = ssub.s32 %s10, 1
      %p173 = scmp.lt.s32.totalorder %s15, 1
      %s174 = scalar_select %p173, %s15, 1
      %s175 = smul.addr %s174, 4
      %s176 = scalar_lea.vmem %s0, %s175
      %p177 = pneg %p36
      %p178 = pneg %p33
      %s179 = smul.u32 16, %s15
      %p180 = scmp.lt.s32.totalorder %s179, 31
      %s181 = scalar_select %p180, %s179, 31
      %s182 = smul.addr %s181, 4
      %s183 = scalar_lea.vmem %s1, %s182
      %p184 = pneg %p62
      %p185 = pneg %p59
      %p186 = pneg %p83
      %p187 = pneg %p80
      %p188 = pneg %p104
      %p189 = pneg %p101
      %p190 = pneg %p125
      %p191 = pneg %p122
      %p192 = scmp.lt.s32.totalorder %s15, 1
      %s193 = scalar_select %p192, %s15, 1
      %s194 = smul.addr %s193, 4
      %s195 = scalar_lea.vmem %s0, %s194
      %s196 = smul.u32 16, %s15
      %p197 = scmp.lt.s32.totalorder %s196, 31
      %s198 = scalar_select %p197, %s196, 31
      %s199 = smul.addr %s198, 4
      %s200 = scalar_lea.vmem %s1, %s199
      %s201 = smul.u32 16, %s15
      %p203 = scmp.eq.s32.totalorder %s15, 0
      // Predicated region
      $region37: #{gcn2_forward.7} parent=35 // pred_check
        %p204 = pneg %p203
      $region38: #{gcn2_forward.7} parent=35 // pred_check_branch
        %206 = sbr.rel (%p204) target = $region40
      $region39: #{gcn2_forward.7} parent=35 // pred_region
        %207 = vst [vmem:[#allocation2] sm:$0xff] 0.0
      $region40: #{gcn2_forward.7} parent=35 // pred_fallthru
        _
      %v208 = vld [vmem:[#allocation2] sm:$0xff]
      %v209 = vld [vmem:[%s195] sm:$0xf]
      %v210 = vld [vmem:[%s200] sm:$0xf]
      %v211 = vld [vmem:[%s200 + $0x4] sm:$0xf]
      %v212 = vld [vmem:[%s200 + $0x8] sm:$0xf]
      %v213 = vld [vmem:[%s200 + $0xc] sm:$0xf]
      %v214 = vld [vmem:[%s200 + $0x10] sm:$0xf]
      %v215 = vld [vmem:[%s200 + $0x14] sm:$0xf]
      %v216 = vld [vmem:[%s200 + $0x18] sm:$0xf]
      %v217 = vld [vmem:[%s200 + $0x1c] sm:$0xf]
      %v218 = vld [vmem:[%s200 + $0x20] sm:$0xf]
      %v219 = vld [vmem:[%s200 + $0x24] sm:$0xf]
      %v220 = vld [vmem:[%s200 + $0x28] sm:$0xf]
      %v221 = vld [vmem:[%s200 + $0x2c] sm:$0xf]
      %v222 = vld [vmem:[%s200 + $0x30] sm:$0xf]
      %v223 = vld [vmem:[%s200 + $0x34] sm:$0xf]
      %v224 = vld [vmem:[%s200 + $0x38] sm:$0xf]
      %v225 = vld [vmem:[%s200 + $0x3c] sm:$0xf]
      %v242 = vunpack.c.l.b16 %v210
      %v243 = vunpack.c.l.b16 %v211
      %v244 = vunpack.c.l.b16 %v212
      %v245 = vunpack.c.l.b16 %v213
      %v246 = vunpack.c.l.b16 %v214
      %v247 = vunpack.c.l.b16 %v215
      %v248 = vunpack.c.l.b16 %v216
      %v249 = vunpack.c.l.b16 %v217
      %v250 = vunpack.c.l.b16 %v218
      %v251 = vunpack.c.l.b16 %v219
      %v252 = vunpack.c.l.b16 %v220
      %v253 = vunpack.c.l.b16 %v221
      %v254 = vunpack.c.l.b16 %v222
      %v255 = vunpack.c.l.b16 %v223
      %v256 = vunpack.c.l.b16 %v224
      %v257 = vunpack.c.l.b16 %v225
      %v258 = vpack.c.b16 %v243, %v242
      %v259 = vpack.c.b16 %v245, %v244
      %v260 = vpack.c.b16 %v247, %v246
      %v261 = vpack.c.b16 %v249, %v248
      %v262 = vpack.c.b16 %v251, %v250
      %v263 = vpack.c.b16 %v253, %v252
      %v264 = vpack.c.b16 %v255, %v254
      %v265 = vpack.c.b16 %v257, %v256
      %274 = vmatprep.subr.bf16.mxu0 0
      %275 = vmatpush1.bf16.msra.mxu0 %v258
      %276 = vmatprep.subr.bf16.mxu0 0
      %277 = vmatpush1.bf16.msra.mxu0 %v259
      %278 = vmatprep.subr.bf16.mxu0 0
      %279 = vmatpush1.bf16.msra.mxu0 %v260
      %280 = vmatprep.subr.bf16.mxu0 0
      %281 = vmatpush1.bf16.msra.mxu0 %v261
      %282 = vmatprep.subr.bf16.mxu0 0
      %283 = vmatpush1.bf16.msra.mxu0 %v262
      %284 = vmatprep.subr.bf16.mxu0 0
      %285 = vmatpush1.bf16.msra.mxu0 %v263
      %286 = vmatprep.subr.bf16.mxu0 0
      %287 = vmatpush1.bf16.msra.mxu0 %v264
      %288 = vmatprep.subr.bf16.mxu0 0
      %289 = vmatpush1.bf16.msra.mxu0 %v265
      %290 = vmatprep.subr.bf16.mxu0 0
      %291 = vmatpush1.bf16.msra.mxu0 0
      %292 = vmatprep.subr.bf16.mxu0 0
      %293 = vmatpush1.bf16.msra.mxu0 0
      %294 = vmatprep.subr.bf16.mxu0 0
      %295 = vmatpush1.bf16.msra.mxu0 0
      %296 = vmatprep.subr.bf16.mxu0 0
      %297 = vmatpush1.bf16.msra.mxu0 0
      %298 = vmatprep.subr.bf16.mxu0 0
      %299 = vmatpush1.bf16.msra.mxu0 0
      %300 = vmatprep.subr.bf16.mxu0 0
      %301 = vmatpush1.bf16.msra.mxu0 0
      %302 = vmatprep.subr.bf16.mxu0 0
      %303 = vmatpush1.bf16.msra.mxu0 0
      %304 = vmatprep.subr.bf16.mxu0 0
      %305 = vmatpush1.bf16.msra.mxu0 0
      %306 = vmatprep.mubr.bf16.mxu0 0
      %307 = vmatmul.mubr.bf16.gmra.mrb[0].mxu0 %v209
      %v308 = vpop.f32.mrb[0].mxu0
      %v309 = vadd.f32 0.0, %v308
      %v310 = vpop.f32.mrb[0].mxu0
      %v311 = vpop.f32.mrb[0].mxu0
      %v312 = vpop.f32.mrb[0].mxu0
      %313 = vdwg.mxu0
      %v314 = vadd.f32 %v208, %v309
      %315 = vst [vmem:[#allocation2] sm:$0xff] %v314
      %p316 = scmp.eq.s32.totalorder %s15, 1
      // Predicated region
      $region41: #{gcn2_forward.7} parent=35 // pred_check
        %p317 = pneg %p316
      $region42: #{gcn2_forward.7} parent=35 // pred_check_branch
        %319 = sbr.rel (%p317) target = $region44
      $region43: #{gcn2_forward.7} parent=35 // pred_region
        %v320 = vld [vmem:[#allocation2] sm:$0xff]
        %v321 = vpack.c.bf16 %v320, %v320
        %v322 = vld [vmem:[%s2] sm:$0xf]
        %v323 = vld [vmem:[%s2 + $0x4] sm:$0xf]
        %v324 = vld [vmem:[%s2 + $0x8] sm:$0xf]
        %v325 = vld [vmem:[%s2 + $0xc] sm:$0xf]
        %v326 = vld [vmem:[%s2 + $0x10] sm:$0xf]
        %v327 = vld [vmem:[%s2 + $0x14] sm:$0xf]
        %v328 = vld [vmem:[%s2 + $0x18] sm:$0xf]
        %v329 = vld [vmem:[%s2 + $0x1c] sm:$0xf]
        %v330 = vld [vmem:[%s2 + $0x20] sm:$0xf]
        %v331 = vld [vmem:[%s2 + $0x24] sm:$0xf]
        %v332 = vld [vmem:[%s2 + $0x28] sm:$0xf]
        %v333 = vld [vmem:[%s2 + $0x2c] sm:$0xf]
        %v334 = vld [vmem:[%s2 + $0x30] sm:$0xf]
        %v335 = vld [vmem:[%s2 + $0x34] sm:$0xf]
        %v336 = vld [vmem:[%s2 + $0x38] sm:$0xf]
        %v337 = vld [vmem:[%s2 + $0x3c] sm:$0xf]
        %v338 = vld [vmem:[%s3] sm:$0x1]
        %v340 = vlaneseq
        %v341 = vshrl.u32 %v340, 7
        %v342 = vsub.s32 0, %v341
        %v343 = vrot.slane %v338, %v342
        %v361 = vunpack.c.l.b16 %v322
        %v362 = vunpack.c.l.b16 %v323
        %v363 = vunpack.c.l.b16 %v324
        %v364 = vunpack.c.l.b16 %v325
        %v365 = vunpack.c.l.b16 %v326
        %v366 = vunpack.c.l.b16 %v327
        %v367 = vunpack.c.l.b16 %v328
        %v368 = vunpack.c.l.b16 %v329
        %v369 = vunpack.c.l.b16 %v330
        %v370 = vunpack.c.l.b16 %v331
        %v371 = vunpack.c.l.b16 %v332
        %v372 = vunpack.c.l.b16 %v333
        %v373 = vunpack.c.l.b16 %v334
        %v374 = vunpack.c.l.b16 %v335
        %v375 = vunpack.c.l.b16 %v336
        %v376 = vunpack.c.l.b16 %v337
        %v377 = vpack.c.b16 %v362, %v361
        %v378 = vpack.c.b16 %v364, %v363
        %v379 = vpack.c.b16 %v366, %v365
        %v380 = vpack.c.b16 %v368, %v367
        %v381 = vpack.c.b16 %v370, %v369
        %v382 = vpack.c.b16 %v372, %v371
        %v383 = vpack.c.b16 %v374, %v373
        %v384 = vpack.c.b16 %v376, %v375
        %393 = vmatprep.subr.bf16.mxu0 0
        %394 = vmatpush1.bf16.msra.mxu0 %v377
        %395 = vmatprep.subr.bf16.mxu0 0
        %396 = vmatpush1.bf16.msra.mxu0 %v378
        %397 = vmatprep.subr.bf16.mxu0 0
        %398 = vmatpush1.bf16.msra.mxu0 %v379
        %399 = vmatprep.subr.bf16.mxu0 0
        %400 = vmatpush1.bf16.msra.mxu0 %v380
        %401 = vmatprep.subr.bf16.mxu0 0
        %402 = vmatpush1.bf16.msra.mxu0 %v381
        %403 = vmatprep.subr.bf16.mxu0 0
        %404 = vmatpush1.bf16.msra.mxu0 %v382
        %405 = vmatprep.subr.bf16.mxu0 0
        %406 = vmatpush1.bf16.msra.mxu0 %v383
        %407 = vmatprep.subr.bf16.mxu0 0
        %408 = vmatpush1.bf16.msra.mxu0 %v384
        %409 = vmatprep.subr.bf16.mxu0 0
        %410 = vmatpush1.bf16.msra.mxu0 0
        %411 = vmatprep.subr.bf16.mxu0 0
        %412 = vmatpush1.bf16.msra.mxu0 0
        %413 = vmatprep.subr.bf16.mxu0 0
        %414 = vmatpush1.bf16.msra.mxu0 0
        %415 = vmatprep.subr.bf16.mxu0 0
        %416 = vmatpush1.bf16.msra.mxu0 0
        %417 = vmatprep.subr.bf16.mxu0 0
        %418 = vmatpush1.bf16.msra.mxu0 0
        %419 = vmatprep.subr.bf16.mxu0 0
        %420 = vmatpush1.bf16.msra.mxu0 0
        %421 = vmatprep.subr.bf16.mxu0 0
        %422 = vmatpush1.bf16.msra.mxu0 0
        %423 = vmatprep.subr.bf16.mxu0 0
        %424 = vmatpush1.bf16.msra.mxu0 0
        %425 = vmatprep.mubr.bf16.mxu0 0
        %426 = vmatmul.mubr.bf16.gmra.mrb[0].mxu0 %v321
        %v427 = vpop.f32.mrb[0].mxu0
        %v428 = vadd.f32 %v343, %v427
        %v429 = vpop.f32.mrb[0].mxu0
        %v430 = vpop.f32.mrb[0].mxu0
        %v431 = vpop.f32.mrb[0].mxu0
        %432 = vdwg.mxu0
        %433 = vst [vmem:[%s4] sm:$0xff] %v428
      $region44: #{gcn2_forward.7} parent=35 // pred_fallthru
        _
      // Predicated region
      $region45: #{gcn2_forward.7} parent=35 // pred_check
        %p434 = pneg %p122
      $region46: #{gcn2_forward.7} parent=35 // pred_check_branch
        %436 = sbr.rel (%p434) target = $region48
      $region47: #{gcn2_forward.7} parent=35 // pred_region
        _
      $region48: #{gcn2_forward.7} parent=35 // pred_fallthru
        _
      // Predicated region
      $region49: #{gcn2_forward.7} parent=35 // pred_check
        %p437 = pneg %p122
      $region50: #{gcn2_forward.7} parent=35 // pred_check_branch
        %439 = sbr.rel (%p437) target = $region52
      $region51: #{gcn2_forward.7} parent=35 // pred_region
        _
      $region52: #{gcn2_forward.7} parent=35 // pred_fallthru
        _
    $region36: #{gcn2_forward.7} parent=5 // pred_fallthru
      _
    %p440 = scmp.le.s32.totalorder 2, %s10
    // Predicated region
    $region53: #{gcn2_forward.7} parent=5 // pred_check
      %p441 = pneg %p440
    $region54: #{gcn2_forward.7} parent=5 // pred_check_branch
      %443 = sbr.rel (%p441) target = $region56
    $region55: #{gcn2_forward.7} parent=5 // pred_region
      %s444 = ssub.s32 %s10, 2
    $region56: #{gcn2_forward.7} parent=5 // pred_fallthru
      _
  $region6: #{gcn2_forward.7} parent=0 // loop_footer
    %s14 = sadd.s32 1, %s10
  $region7: #{gcn2_forward.7} parent=0 // loop_footer_branch
    %9 = sbr.rel target = $region3
  $region8: #{gcn2_forward.7} parent=0 // loop_exit
    _

// kernel: gcn2_forward.4
$region0: #{gcn2_forward.4}
  #allocation0 [shape = 'u32[]', space=smem, size = 0x4, offset = 0x4, fixed_abs, tag = 'smem constant byte address 0x4 - core index']
  #allocation1 [shape = 'u32[144,128]{1,0:T(1,128)}', space=vmem, size = 0x12000, scoped, tag = 'internal scratch']
  #allocation2 [shape = 'f32[128,128]{1,0:T(8,128)}', space=vmem, size = 0x10000, scoped, tag = 'scratch operand']
  %s0 = inlined_call_operand.vmem [shape: bf16[256,256], index: 0, kind: input, shape index: {}]
  %s1 = inlined_call_operand.vmem [shape: bf16[256,128], index: 1, kind: input, shape index: {}]
  %s2 = inlined_call_operand.vmem [shape: bf16[128,128], index: 2, kind: input, shape index: {}]
  %s3 = inlined_call_operand.vmem [shape: f32[1,128], index: 3, kind: input, shape index: {}]
  %s4 = inlined_call_operand.vmem [shape: bf16[256,128], index: 4, kind: output, shape index: {}]
  %s5 = sld [smem:[#allocation0]]
  $region98: #{gcn2_forward.4} parent=0
    _
  %s7 = ssub.s32 1, %s5
  %s8 = scalar_select 0, %s7, %s5
  $region1: #{gcn2_forward.4} parent=0
    #allocation3 [shape = 'u8[65536]{0}', space=vmem, size = 0x10000, scoped, tag = 'input window, operand 0']
    loop: start=0, step=1, limit=6
    $region2: #{gcn2_forward.4} parent=1 // loop_pre_header
      _
    $region3: #{gcn2_forward.4} parent=1 // loop_header
      %s10 = sphi 0, %s14
      %p11 = scmp.ge.s32.totalorder %s10, 6
      %s17 = sphi 0, %s29
      %s18 = sphi 0, %s25
      %s19 = sphi 0, %s17
      %s20 = sphi 0, %s18
      %s21 = sphi 0, %s19
      %s22 = sphi 0, %s20
      %s34 = sphi 0, %s36
      %s37 = sphi 0, %s34
      %s38 = sphi 0, %s37
      %s54 = sphi 0, %s38
      %s60 = sphi 0, %s62
      %s63 = sphi 0, %s60
      %s64 = sphi 0, %s63
      %s80 = sphi 0, %s64
      %s84 = sphi 0, %s84
      %s86 = sphi 0, %s84
      %s87 = sphi 0, %s86
      %s101 = sphi 0, %s87
      %s105 = sphi 0, %s105
      %s107 = sphi 0, %s105
      %s108 = sphi 0, %s107
      %s122 = sphi 0, %s108
      %s128 = sphi 0, %s130
      %s131 = sphi 0, %s128
      %s132 = sphi 0, %s131
      %s148 = sphi 0, %s132
    $region4: #{gcn2_forward.4} parent=1 // loop_header_branch
      %13 = sbr.rel (%p11) target = $region8
    $region5: #{gcn2_forward.4} parent=1 // loop_body
      %s15 = ssub.s32 %s10, 1
      %s16 = ssub.s32 %s10, 2
      %s23 = sadd.s32 1, %s18
      %p24 = scmp.ge.s32.totalorder %s23, 2
      %s25 = scalar_select %p24, 0, %s23
      %s26 = sadd.s32 1, %s17
      %s27 = scalar_select %p24, %s26, %s17
      %p28 = scmp.ge.s32.totalorder %s27, 2
      %s29 = scalar_select %p28, 0, %s27
      %s30 = ssub.s32 %s17, %s29
      %s31 = ssub.s32 %s18, %s25
      %s32 = sor.u32 %s30, %s31
      %p33 = scmp.eq.s32.totalorder %s32, 0
      %s35 = sadd.s32 %s34, 1
      %s36 = scalar_select %p33, %s34, %s35
      %p39 = pneg %p33
      %p40 = scmp.eq.s32.totalorder %s10, 3
      %p41 = por %p39, %p40
      %p42 = scmp.ne.s32.totalorder %s34, %s37
      %p43 = scmp.eq.s32.totalorder %s10, 0
      %p44 = por %p42, %p43
      %p45 = scmp.ne.s32.totalorder %s34, %s37
      %p46 = scmp.eq.s32.totalorder %s15, 3
      %p47 = por %p45, %p46
      %p48 = scmp.ne.s32.totalorder %s37, %s38
      %p49 = scmp.eq.s32.totalorder %s15, 0
      %p50 = por %p48, %p49
      %p51 = scmp.ne.s32.totalorder %s37, %s38
      %p52 = scmp.eq.s32.totalorder %s16, 3
      %p53 = por %p51, %p52
      %p55 = scmp.ne.s32.totalorder %s38, %s54
      %p56 = scmp.eq.s32.totalorder %s16, 0
      %p57 = por %p55, %p56
      %s58 = ssub.s32 %s18, %s25
      %p59 = scmp.eq.s32.totalorder %s58, 0
      %s61 = sadd.s32 %s60, 1
      %s62 = scalar_select %p59, %s60, %s61
      %p65 = pneg %p59
      %p66 = scmp.eq.s32.totalorder %s10, 3
      %p67 = por %p65, %p66
      %p68 = scmp.ne.s32.totalorder %s60, %s63
      %p69 = scmp.eq.s32.totalorder %s10, 0
      %p70 = por %p68, %p69
      %p71 = scmp.ne.s32.totalorder %s60, %s63
      %p72 = scmp.eq.s32.totalorder %s15, 3
      %p73 = por %p71, %p72
      %p74 = scmp.ne.s32.totalorder %s63, %s64
      %p75 = scmp.eq.s32.totalorder %s15, 0
      %p76 = por %p74, %p75
      %p77 = scmp.ne.s32.totalorder %s63, %s64
      %p78 = scmp.eq.s32.totalorder %s16, 3
      %p79 = por %p77, %p78
      %p81 = scmp.ne.s32.totalorder %s64, %s80
      %p82 = scmp.eq.s32.totalorder %s16, 0
      %p83 = por %p81, %p82
      %s85 = sadd.s32 %s84, 1
      %p88 = scmp.eq.s32.totalorder %s10, 3
      %p89 = scmp.ne.s32.totalorder %s84, %s86
      %p90 = scmp.eq.s32.totalorder %s10, 0
      %p91 = por %p89, %p90
      %p92 = scmp.ne.s32.totalorder %s84, %s86
      %p93 = scmp.eq.s32.totalorder %s15, 3
      %p94 = por %p92, %p93
      %p95 = scmp.ne.s32.totalorder %s86, %s87
      %p96 = scmp.eq.s32.totalorder %s15, 0
      %p97 = por %p95, %p96
      %p98 = scmp.ne.s32.totalorder %s86, %s87
      %p99 = scmp.eq.s32.totalorder %s16, 3
      %p100 = por %p98, %p99
      %p102 = scmp.ne.s32.totalorder %s87, %s101
      %p103 = scmp.eq.s32.totalorder %s16, 0
      %p104 = por %p102, %p103
      %s106 = sadd.s32 %s105, 1
      %p109 = scmp.eq.s32.totalorder %s10, 3
      %p110 = scmp.ne.s32.totalorder %s105, %s107
      %p111 = scmp.eq.s32.totalorder %s10, 0
      %p112 = por %p110, %p111
      %p113 = scmp.ne.s32.totalorder %s105, %s107
      %p114 = scmp.eq.s32.totalorder %s15, 3
      %p115 = por %p113, %p114
      %p116 = scmp.ne.s32.totalorder %s107, %s108
      %p117 = scmp.eq.s32.totalorder %s15, 0
      %p118 = por %p116, %p117
      %p119 = scmp.ne.s32.totalorder %s107, %s108
      %p120 = scmp.eq.s32.totalorder %s16, 3
      %p121 = por %p119, %p120
      %p123 = scmp.ne.s32.totalorder %s108, %s122
      %p124 = scmp.eq.s32.totalorder %s16, 0
      %p125 = por %p123, %p124
      %s126 = ssub.s32 %s17, %s29
      %p127 = scmp.eq.s32.totalorder %s126, 0
      %s129 = sadd.s32 %s128, 1
      %s130 = scalar_select %p127, %s128, %s129
      %p133 = pneg %p127
      %p134 = scmp.eq.s32.totalorder %s10, 3
      %p135 = por %p133, %p134
      %p136 = scmp.ne.s32.totalorder %s128, %s131
      %p137 = scmp.eq.s32.totalorder %s10, 0
      %p138 = por %p136, %p137
      %p139 = scmp.ne.s32.totalorder %s128, %s131
      %p140 = scmp.eq.s32.totalorder %s15, 3
      %p141 = por %p139, %p140
      %p142 = scmp.ne.s32.totalorder %s131, %s132
      %p143 = scmp.eq.s32.totalorder %s15, 0
      %p144 = por %p142, %p143
      %p145 = scmp.ne.s32.totalorder %s131, %s132
      %p146 = scmp.eq.s32.totalorder %s16, 3
      %p147 = por %p145, %p146
      %p149 = scmp.ne.s32.totalorder %s132, %s148
      %p150 = scmp.eq.s32.totalorder %s16, 0
      %p151 = por %p149, %p150
      %p152 = scmp.le.s32.totalorder 1, %s10
      %p153 = scmp.lt.s32.totalorder %s10, 5
      %p154 = pnand %p152, %p153
      %p155 = pneg %p154
      // Predicated region
      $region9: #{gcn2_forward.4} parent=5 // pred_check
        _
      $region10: #{gcn2_forward.4} parent=5 // pred_check_branch
        %157 = sbr.rel (%p154) target = $region12
      $region11: #{gcn2_forward.4} parent=5 // pred_region
        %s158 = ssub.s32 %s10, 1
        // Predicated region
        $region13: #{gcn2_forward.4} parent=11 // pred_check
          %p159 = pneg %p97
        $region14: #{gcn2_forward.4} parent=11 // pred_check_branch
          %161 = sbr.rel (%p159) target = $region16
        $region15: #{gcn2_forward.4} parent=11 // pred_region
          _
        $region16: #{gcn2_forward.4} parent=11 // pred_fallthru
          _
        // Predicated region
        $region17: #{gcn2_forward.4} parent=11 // pred_check
          %p162 = pneg %p118
        $region18: #{gcn2_forward.4} parent=11 // pred_check_branch
          %164 = sbr.rel (%p162) target = $region20
        $region19: #{gcn2_forward.4} parent=11 // pred_region
          _
        $region20: #{gcn2_forward.4} parent=11 // pred_fallthru
          _
      $region12: #{gcn2_forward.4} parent=5 // pred_fallthru
        _
      %p165 = scmp.lt.s32.totalorder %s10, 4
      // Predicated region
      $region21: #{gcn2_forward.4} parent=5 // pred_check
        %p166 = pneg %p165
      $region22: #{gcn2_forward.4} parent=5 // pred_check_branch
        %168 = sbr.rel (%p166) target = $region24
      $region23: #{gcn2_forward.4} parent=5 // pred_region
        // Predicated region
        $region25: #{gcn2_forward.4} parent=23 // pred_check
          %p169 = pneg %p44
        $region26: #{gcn2_forward.4} parent=23 // pred_check_branch
          %171 = sbr.rel (%p169) target = $region28
        $region27: #{gcn2_forward.4} parent=23 // pred_region
          %s172 = sand.u32 %s34, 1
          %s173 = sand.u32 %s34, 1
          %s174 = smul.addr %s173, 64
          %s175 = scalar_lea.vmem [#allocation3], %s174
          %s176 = smul.u32 16, %s17
          %s177 = smul.addr %s176, 2
          %s178 = sadd.s32 %s18, %s177
          %s179 = smul.addr %s178, 4
          %s180 = scalar_lea.vmem %s0, %s179
          // Predicated region
          $region29: #{gcn2_forward.4} parent=27 // pred_check
            _
          $region30: #{gcn2_forward.4} parent=27 // pred_check_branch
            %182 = sbr.rel (0) target = $region32
          $region31: #{gcn2_forward.4} parent=27 // pred_region
            // Predicated region
            $region33: #{gcn2_forward.4} parent=31 // pred_check
              _
            $region34: #{gcn2_forward.4} parent=31 // pred_check_branch
              %184 = sbr.rel target = $region36
            $region35: #{gcn2_forward.4} parent=31 // pred_region
              // Predicated region
              $region48: #{gcn2_forward.4} parent=35 // pred_check
                _
              $region49: #{gcn2_forward.4} parent=35 // pred_check_branch
                %229 = sbr.rel (0) target = $region51
              $region50: #{gcn2_forward.4} parent=35 // pred_region
                loop: start=0, step=1, limit=1
                $region52: #{gcn2_forward.4} parent=50 // loop_pre_header
                  _
                $region53: #{gcn2_forward.4} parent=50 // loop_header
                  %s231 = sphi 0, %s235
                  %p232 = scmp.ge.s32.totalorder %s231, 1
                  %s236 = sphi %s180, %s180
                  %s237 = sphi %s175, %s175
                $region54: #{gcn2_forward.4} parent=50 // loop_header_branch
                  %234 = sbr.rel (%p232) target = $region58
                $region55: #{gcn2_forward.4} parent=50 // loop_body
                  _
                $region56: #{gcn2_forward.4} parent=50 // loop_footer
                  %s235 = sadd.s32 1, %s231
                $region57: #{gcn2_forward.4} parent=50 // loop_footer_branch
                  %230 = sbr.rel target = $region53
                $region58: #{gcn2_forward.4} parent=50 // loop_exit
                  _
                loop: start=0, step=1, limit=1
                $region59: #{gcn2_forward.4} parent=50 // loop_pre_header
                  _
                $region60: #{gcn2_forward.4} parent=50 // loop_header
                  %s240 = sphi 0, %s244
                  %p241 = scmp.ge.s32.totalorder %s240, 1
                  %s245 = sphi %s180, %s180
                  %s246 = sphi %s175, %s175
                $region61: #{gcn2_forward.4} parent=50 // loop_header_branch
                  %243 = sbr.rel (%p241) target = $region65
                $region62: #{gcn2_forward.4} parent=50 // loop_body
                  %v247 = vld [vmem:[%s245] sm:$0xf]
                  %248 = vst [vmem:[%s246] sm:$0xf] %v247
                  %v249 = vld [vmem:[%s245 + $0x8] sm:$0xf]
                  %250 = vst [vmem:[%s246 + $0x4] sm:$0xf] %v249
                  %v251 = vld [vmem:[%s245 + $0x10] sm:$0xf]
                  %252 = vst [vmem:[%s246 + $0x8] sm:$0xf] %v251
                  %v253 = vld [vmem:[%s245 + $0x18] sm:$0xf]
                  %254 = vst [vmem:[%s246 + $0xc] sm:$0xf] %v253
                  %v255 = vld [vmem:[%s245 + $0x20] sm:$0xf]
                  %256 = vst [vmem:[%s246 + $0x10] sm:$0xf] %v255
                  %v257 = vld [vmem:[%s245 + $0x28] sm:$0xf]
                  %258 = vst [vmem:[%s246 + $0x14] sm:$0xf] %v257
                  %v259 = vld [vmem:[%s245 + $0x30] sm:$0xf]
                  %260 = vst [vmem:[%s246 + $0x18] sm:$0xf] %v259
                  %v261 = vld [vmem:[%s245 + $0x38] sm:$0xf]
                  %262 = vst [vmem:[%s246 + $0x1c] sm:$0xf] %v261
                  %v263 = vld [vmem:[%s245 + $0x40] sm:$0xf]
                  %264 = vst [vmem:[%s246 + $0x20] sm:$0xf] %v263
                  %v265 = vld [vmem:[%s245 + $0x48] sm:$0xf]
                  %266 = vst [vmem:[%s246 + $0x24] sm:$0xf] %v265
                  %v267 = vld [vmem:[%s245 + $0x50] sm:$0xf]
                  %268 = vst [vmem:[%s246 + $0x28] sm:$0xf] %v267
                  %v269 = vld [vmem:[%s245 + $0x58] sm:$0xf]
                  %270 = vst [vmem:[%s246 + $0x2c] sm:$0xf] %v269
                  %v271 = vld [vmem:[%s245 + $0x60] sm:$0xf]
                  %272 = vst [vmem:[%s246 + $0x30] sm:$0xf] %v271
                  %v273 = vld [vmem:[%s245 + $0x68] sm:$0xf]
                  %274 = vst [vmem:[%s246 + $0x34] sm:$0xf] %v273
                  %v275 = vld [vmem:[%s245 + $0x70] sm:$0xf]
                  %276 = vst [vmem:[%s246 + $0x38] sm:$0xf] %v275
                  %v277 = vld [vmem:[%s245 + $0x78] sm:$0xf]
                  %278 = vst [vmem:[%s246 + $0x3c] sm:$0xf] %v277
                $region63: #{gcn2_forward.4} parent=50 // loop_footer
                  %s244 = sadd.s32 1, %s240
                $region64: #{gcn2_forward.4} parent=50 // loop_footer_branch
                  %239 = sbr.rel target = $region60
                $region65: #{gcn2_forward.4} parent=50 // loop_exit
                  _
              $region51: #{gcn2_forward.4} parent=35 // pred_fallthru
                _
            $region36: #{gcn2_forward.4} parent=31 // pred_fallthru
              _
            // Predicated region
            $region37: #{gcn2_forward.4} parent=31 // pred_check
              _
            $region38: #{gcn2_forward.4} parent=31 // pred_check_branch
              %186 = sbr.rel (0) target = $region40
            $region39: #{gcn2_forward.4} parent=31 // pred_region
              loop: start=0, step=1, limit=1
              $region41: #{gcn2_forward.4} parent=39 // loop_pre_header
                _
              $region42: #{gcn2_forward.4} parent=39 // loop_header
                %s189 = sphi 0, %s193
                %p190 = scmp.ge.s32.totalorder %s189, 1
                %s194 = sphi %s180, %s180
                %s195 = sphi %s175, %s175
              $region43: #{gcn2_forward.4} parent=39 // loop_header_branch
                %192 = sbr.rel (%p190) target = $region47
              $region44: #{gcn2_forward.4} parent=39 // loop_body
                %v196 = vld [vmem:[%s194] sm:$0xf]
                %197 = vst [vmem:[%s195] sm:$0xf] %v196
                %v198 = vld [vmem:[%s194 + $0x8] sm:$0xf]
                %199 = vst [vmem:[%s195 + $0x4] sm:$0xf] %v198
                %v200 = vld [vmem:[%s194 + $0x10] sm:$0xf]
                %201 = vst [vmem:[%s195 + $0x8] sm:$0xf] %v200
                %v202 = vld [vmem:[%s194 + $0x18] sm:$0xf]
                %203 = vst [vmem:[%s195 + $0xc] sm:$0xf] %v202
                %v204 = vld [vmem:[%s194 + $0x20] sm:$0xf]
                %205 = vst [vmem:[%s195 + $0x10] sm:$0xf] %v204
                %v206 = vld [vmem:[%s194 + $0x28] sm:$0xf]
                %207 = vst [vmem:[%s195 + $0x14] sm:$0xf] %v206
                %v208 = vld [vmem:[%s194 + $0x30] sm:$0xf]
                %209 = vst [vmem:[%s195 + $0x18] sm:$0xf] %v208
                %v210 = vld [vmem:[%s194 + $0x38] sm:$0xf]
                %211 = vst [vmem:[%s195 + $0x1c] sm:$0xf] %v210
                %v212 = vld [vmem:[%s194 + $0x40] sm:$0xf]
                %213 = vst [vmem:[%s195 + $0x20] sm:$0xf] %v212
                %v214 = vld [vmem:[%s194 + $0x48] sm:$0xf]
                %215 = vst [vmem:[%s195 + $0x24] sm:$0xf] %v214
                %v216 = vld [vmem:[%s194 + $0x50] sm:$0xf]
                %217 = vst [vmem:[%s195 + $0x28] sm:$0xf] %v216
                %v218 = vld [vmem:[%s194 + $0x58] sm:$0xf]
                %219 = vst [vmem:[%s195 + $0x2c] sm:$0xf] %v218
                %v220 = vld [vmem:[%s194 + $0x60] sm:$0xf]
                %221 = vst [vmem:[%s195 + $0x30] sm:$0xf] %v220
                %v222 = vld [vmem:[%s194 + $0x68] sm:$0xf]
                %223 = vst [vmem:[%s195 + $0x34] sm:$0xf] %v222
                %v224 = vld [vmem:[%s194 + $0x70] sm:$0xf]
                %225 = vst [vmem:[%s195 + $0x38] sm:$0xf] %v224
                %v226 = vld [vmem:[%s194 + $0x78] sm:$0xf]
                %227 = vst [vmem:[%s195 + $0x3c] sm:$0xf] %v226
              $region45: #{gcn2_forward.4} parent=39 // loop_footer
                %s193 = sadd.s32 1, %s189
              $region46: #{gcn2_forward.4} parent=39 // loop_footer_branch
                %188 = sbr.rel target = $region42
              $region47: #{gcn2_forward.4} parent=39 // loop_exit
                _
            $region40: #{gcn2_forward.4} parent=31 // pred_fallthru
              _
          $region32: #{gcn2_forward.4} parent=27 // pred_fallthru
            _
          %279 = vnop
        $region28: #{gcn2_forward.4} parent=23 // pred_fallthru
          _
        // Predicated region
        $region66: #{gcn2_forward.4} parent=23 // pred_check
          %p280 = pneg %p70
        $region67: #{gcn2_forward.4} parent=23 // pred_check_branch
          %282 = sbr.rel (%p280) target = $region69
        $region68: #{gcn2_forward.4} parent=23 // pred_region
          %s283 = smul.u32 16, %s18
          %p284 = scmp.lt.s32.totalorder %s283, 31
          %s285 = scalar_select %p284, %s283, 31
          %s286 = smul.addr %s285, 4
          %s287 = scalar_lea.vmem %s1, %s286
          %s288 = smul.u32 16, %s18
        $region69: #{gcn2_forward.4} parent=23 // pred_fallthru
          _
      $region24: #{gcn2_forward.4} parent=5 // pred_fallthru
        _
      %p289 = scmp.le.s32.totalorder 1, %s10
      %p290 = scmp.lt.s32.totalorder %s10, 5
      %p291 = pnand %p289, %p290
      %p292 = pneg %p291
      // Predicated region
      $region70: #{gcn2_forward.4} parent=5 // pred_check
        _
      $region71: #{gcn2_forward.4} parent=5 // pred_check_branch
        %294 = sbr.rel (%p291) target = $region73
      $region72: #{gcn2_forward.4} parent=5 // pred_region
        %s295 = ssub.s32 %s10, 1
        %s296 = sand.u32 %s37, 1
        %s297 = sand.u32 %s37, 1
        %s298 = smul.addr %s297, 64
        %s299 = scalar_lea.vmem [#allocation3], %s298
        // Predicated region
        $region74: #{gcn2_forward.4} parent=72 // pred_check
          %p300 = pneg %p50
        $region75: #{gcn2_forward.4} parent=72 // pred_check_branch
          %302 = sbr.rel (%p300) target = $region77
        $region76: #{gcn2_forward.4} parent=72 // pred_region
          _
        $region77: #{gcn2_forward.4} parent=72 // pred_fallthru
          _
        %s303 = sand.u32 %s37, 1
        %s304 = sand.u32 %s37, 1
        %s305 = smul.addr %s304, 64
        %s306 = scalar_lea.vmem [#allocation3], %s305
        %p307 = pneg %p50
        %p308 = pneg %p47
        %s309 = smul.u32 16, %s20
        %p310 = scmp.lt.s32.totalorder %s309, 31
        %s311 = scalar_select %p310, %s309, 31
        %s312 = smul.addr %s311, 4
        %s313 = scalar_lea.vmem %s1, %s312
        %p314 = pneg %p76
        %p315 = pneg %p73
        %p316 = pneg %p97
        %p317 = pneg %p94
        %p318 = pneg %p118
        %p319 = pneg %p115
        %p320 = pneg %p144
        %p321 = pneg %p141
        %s322 = smul.u32 16, %s19
        %p323 = scmp.lt.s32.totalorder %s322, 31
        %s324 = scalar_select %p323, %s322, 31
        %s325 = smul.addr %s324, 4
        %s326 = scalar_lea.vmem %s4, %s325
        %s327 = smul.u32 16, %s19
        %s328 = smul.u32 16, %s20
        %p329 = scmp.lt.s32.totalorder %s328, 31
        %s330 = scalar_select %p329, %s328, 31
        %s331 = smul.addr %s330, 4
        %s332 = scalar_lea.vmem %s1, %s331
        %s333 = smul.u32 16, %s20
        %s334 = smul.u32 16, %s19
        %p335 = scmp.lt.s32.totalorder %s334, 31
        %s336 = scalar_select %p335, %s334, 31
        %s337 = smul.addr %s336, 4
        %s338 = scalar_lea.vmem %s4, %s337
        %s339 = smul.u32 16, %s19
        %p341 = scmp.eq.s32.totalorder %s20, 0
        // Predicated region
        $region78: #{gcn2_forward.4} parent=72 // pred_check
          %p342 = pneg %p341
        $region79: #{gcn2_forward.4} parent=72 // pred_check_branch
          %344 = sbr.rel (%p342) target = $region81
        $region80: #{gcn2_forward.4} parent=72 // pred_region
          %345 = vst [vmem:[#allocation2] sm:$0xff] 0.0
          %346 = vst [vmem:[#allocation2 + $0x8] sm:$0xff] 0.0
          %347 = vst [vmem:[#allocation2 + $0x10] sm:$0xff] 0.0
          %348 = vst [vmem:[#allocation2 + $0x18] sm:$0xff] 0.0
          %349 = vst [vmem:[#allocation2 + $0x20] sm:$0xff] 0.0
          %350 = vst [vmem:[#allocation2 + $0x28] sm:$0xff] 0.0
          %351 = vst [vmem:[#allocation2 + $0x30] sm:$0xff] 0.0
          %352 = vst [vmem:[#allocation2 + $0x38] sm:$0xff] 0.0
          %353 = vst [vmem:[#allocation2 + $0x40] sm:$0xff] 0.0
          %354 = vst [vmem:[#allocation2 + $0x48] sm:$0xff] 0.0
          %355 = vst [vmem:[#allocation2 + $0x50] sm:$0xff] 0.0
          %356 = vst [vmem:[#allocation2 + $0x58] sm:$0xff] 0.0
          %357 = vst [vmem:[#allocation2 + $0x60] sm:$0xff] 0.0
          %358 = vst [vmem:[#allocation2 + $0x68] sm:$0xff] 0.0
          %359 = vst [vmem:[#allocation2 + $0x70] sm:$0xff] 0.0
          %360 = vst [vmem:[#allocation2 + $0x78] sm:$0xff] 0.0
        $region81: #{gcn2_forward.4} parent=72 // pred_fallthru
          _
        %v361 = vld [vmem:[#allocation2] sm:$0xff]
        %v362 = vld [vmem:[#allocation2 + $0x8] sm:$0xff]
        %v363 = vld [vmem:[#allocation2 + $0x10] sm:$0xff]
        %v364 = vld [vmem:[#allocation2 + $0x18] sm:$0xff]
        %v365 = vld [vmem:[#allocation2 + $0x20] sm:$0xff]
        %v366 = vld [vmem:[#allocation2 + $0x28] sm:$0xff]
        %v367 = vld [vmem:[#allocation2 + $0x30] sm:$0xff]
        %v368 = vld [vmem:[#allocation2 + $0x38] sm:$0xff]
        %v369 = vld [vmem:[#allocation2 + $0x40] sm:$0xff]
        %v370 = vld [vmem:[#allocation2 + $0x48] sm:$0xff]
        %v371 = vld [vmem:[#allocation2 + $0x50] sm:$0xff]
        %v372 = vld [vmem:[#allocation2 + $0x58] sm:$0xff]
        %v373 = vld [vmem:[#allocation2 + $0x60] sm:$0xff]
        %v374 = vld [vmem:[#allocation2 + $0x68] sm:$0xff]
        %v375 = vld [vmem:[#allocation2 + $0x70] sm:$0xff]
        %v376 = vld [vmem:[#allocation2 + $0x78] sm:$0xff]
        %v377 = vld [vmem:[%s299] sm:$0xf]
        %v378 = vld [vmem:[%s299 + $0x4] sm:$0xf]
        %v379 = vld [vmem:[%s299 + $0x8] sm:$0xf]
        %v380 = vld [vmem:[%s299 + $0xc] sm:$0xf]
        %v381 = vld [vmem:[%s299 + $0x10] sm:$0xf]
        %v382 = vld [vmem:[%s299 + $0x14] sm:$0xf]
        %v383 = vld [vmem:[%s299 + $0x18] sm:$0xf]
        %v384 = vld [vmem:[%s299 + $0x1c] sm:$0xf]
        %v385 = vld [vmem:[%s299 + $0x20] sm:$0xf]
        %v386 = vld [vmem:[%s299 + $0x24] sm:$0xf]
        %v387 = vld [vmem:[%s299 + $0x28] sm:$0xf]
        %v388 = vld [vmem:[%s299 + $0x2c] sm:$0xf]
        %v389 = vld [vmem:[%s299 + $0x30] sm:$0xf]
        %v390 = vld [vmem:[%s299 + $0x34] sm:$0xf]
        %v391 = vld [vmem:[%s299 + $0x38] sm:$0xf]
        %v392 = vld [vmem:[%s299 + $0x3c] sm:$0xf]
        %v393 = vld [vmem:[%s332] sm:$0xf]
        %v394 = vld [vmem:[%s332 + $0x4] sm:$0xf]
        %v395 = vld [vmem:[%s332 + $0x8] sm:$0xf]
        %v396 = vld [vmem:[%s332 + $0xc] sm:$0xf]
        %v397 = vld [vmem:[%s332 + $0x10] sm:$0xf]
        %v398 = vld [vmem:[%s332 + $0x14] sm:$0xf]
        %v399 = vld [vmem:[%s332 + $0x18] sm:$0xf]
        %v400 = vld [vmem:[%s332 + $0x1c] sm:$0xf]
        %v401 = vld [vmem:[%s332 + $0x20] sm:$0xf]
        %v402 = vld [vmem:[%s332 + $0x24] sm:$0xf]
        %v403 = vld [vmem:[%s332 + $0x28] sm:$0xf]
        %v404 = vld [vmem:[%s332 + $0x2c] sm:$0xf]
        %v405 = vld [vmem:[%s332 + $0x30] sm:$0xf]
        %v406 = vld [vmem:[%s332 + $0x34] sm:$0xf]
        %v407 = vld [vmem:[%s332 + $0x38] sm:$0xf]
        %v408 = vld [vmem:[%s332 + $0x3c] sm:$0xf]
        %v425 = vunpack.c.l.b16 %v377
        %v426 = vunpack.c.l.b16 %v378
        %v427 = vunpack.c.l.b16 %v379
        %v428 = vunpack.c.l.b16 %v380
        %v429 = vunpack.c.l.b16 %v381
        %v430 = vunpack.c.l.b16 %v382
        %v431 = vunpack.c.l.b16 %v383
        %v432 = vunpack.c.l.b16 %v384
        %v433 = vunpack.c.l.b16 %v385
        %v434 = vunpack.c.l.b16 %v386
        %v435 = vunpack.c.l.b16 %v387
        %v436 = vunpack.c.l.b16 %v388
        %v437 = vunpack.c.l.b16 %v389
        %v438 = vunpack.c.l.b16 %v390
        %v439 = vunpack.c.l.b16 %v391
        %v440 = vunpack.c.l.b16 %v392
        %v441 = vpack.c.b16 %v426, %v425
        %v442 = vpack.c.b16 %v428, %v427
        %v443 = vpack.c.b16 %v430, %v429
        %v444 = vpack.c.b16 %v432, %v431
        %v445 = vpack.c.b16 %v434, %v433
        %v446 = vpack.c.b16 %v436, %v435
        %v447 = vpack.c.b16 %v438, %v437
        %v448 = vpack.c.b16 %v440, %v439
        %v473 = vunpack.c.l.b16 %v393
        %v474 = vunpack.c.l.b16 %v394
        %v475 = vunpack.c.l.b16 %v395
        %v476 = vunpack.c.l.b16 %v396
        %v477 = vunpack.c.l.b16 %v397
        %v478 = vunpack.c.l.b16 %v398
        %v479 = vunpack.c.l.b16 %v399
        %v480 = vunpack.c.l.b16 %v400
        %v481 = vunpack.c.l.b16 %v401
        %v482 = vunpack.c.l.b16 %v402
        %v483 = vunpack.c.l.b16 %v403
        %v484 = vunpack.c.l.b16 %v404
        %v485 = vunpack.c.l.b16 %v405
        %v486 = vunpack.c.l.b16 %v406
        %v487 = vunpack.c.l.b16 %v407
        %v488 = vunpack.c.l.b16 %v408
        %v489 = vpack.c.b16 %v474, %v473
        %v490 = vpack.c.b16 %v476, %v475
        %v491 = vpack.c.b16 %v478, %v477
        %v492 = vpack.c.b16 %v480, %v479
        %v493 = vpack.c.b16 %v482, %v481
        %v494 = vpack.c.b16 %v484, %v483
        %v495 = vpack.c.b16 %v486, %v485
        %v496 = vpack.c.b16 %v488, %v487
        %505 = vmatprep.subr.bf16.mxu0 0
        %506 = vmatpush1.bf16.msra.mxu0 %v489
        %507 = vmatprep.subr.bf16.mxu0 0
        %508 = vmatpush1.bf16.msra.mxu0 %v490
        %509 = vmatprep.subr.bf16.mxu0 0
        %510 = vmatpush1.bf16.msra.mxu0 %v491
        %511 = vmatprep.subr.bf16.mxu0 0
        %512 = vmatpush1.bf16.msra.mxu0 %v492
        %513 = vmatprep.subr.bf16.mxu0 0
        %514 = vmatpush1.bf16.msra.mxu0 %v493
        %515 = vmatprep.subr.bf16.mxu0 0
        %516 = vmatpush1.bf16.msra.mxu0 %v494
        %517 = vmatprep.subr.bf16.mxu0 0
        %518 = vmatpush1.bf16.msra.mxu0 %v495
        %519 = vmatprep.subr.bf16.mxu0 0
        %520 = vmatpush1.bf16.msra.mxu0 %v496
        %521 = vmatprep.subr.bf16.mxu0 0
        %522 = vmatpush1.bf16.msra.mxu0 0
        %523 = vmatprep.subr.bf16.mxu0 0
        %524 = vmatpush1.bf16.msra.mxu0 0
        %525 = vmatprep.subr.bf16.mxu0 0
        %526 = vmatpush1.bf16.msra.mxu0 0
        %527 = vmatprep.subr.bf16.mxu0 0
        %528 = vmatpush1.bf16.msra.mxu0 0
        %529 = vmatprep.subr.bf16.mxu0 0
        %530 = vmatpush1.bf16.msra.mxu0 0
        %531 = vmatprep.subr.bf16.mxu0 0
        %532 = vmatpush1.bf16.msra.mxu0 0
        %533 = vmatprep.subr.bf16.mxu0 0
        %534 = vmatpush1.bf16.msra.mxu0 0
        %535 = vmatprep.subr.bf16.mxu0 0
        %536 = vmatpush1.bf16.msra.mxu0 0
        %537 = vmatprep.mubr.bf16.mxu0 0
        %538 = vmatmul.mubr.bf16.gmra.mrb[0].mxu0 %v441
        %v539 = vpop.f32.mrb[0].mxu0
        %v540 = vadd.f32 0.0, %v539
        %v541 = vpop.f32.mrb[0].mxu0
        %v542 = vpop.f32.mrb[0].mxu0
        %v543 = vadd.f32 0.0, %v542
        %v544 = vpop.f32.mrb[0].mxu0
        %545 = vmatprep.mubr.bf16.mxu0 0
        %546 = vmatmul.mubr.bf16.gmra.mrb[0].mxu0 %v442
        %v547 = vpop.f32.mrb[0].mxu0
        %v548 = vadd.f32 0.0, %v547
        %v549 = vpop.f32.mrb[0].mxu0
        %v550 = vpop.f32.mrb[0].mxu0
        %v551 = vadd.f32 0.0, %v550
        %v552 = vpop.f32.mrb[0].mxu0
        %553 = vmatprep.mubr.bf16.mxu0 0
        %554 = vmatmul.mubr.bf16.gmra.mrb[0].mxu0 %v443
        %v555 = vpop.f32.mrb[0].mxu0
        %v556 = vadd.f32 0.0, %v555
        %v557 = vpop.f32.mrb[0].mxu0
        %v558 = vpop.f32.mrb[0].mxu0
        %v559 = vadd.f32 0.0, %v558
        %v560 = vpop.f32.mrb[0].mxu0
        %561 = vmatprep.mubr.bf16.mxu0 0
        %562 = vmatmul.mubr.bf16.gmra.mrb[0].mxu0 %v444
        %v563 = vpop.f32.mrb[0].mxu0
        %v564 = vadd.f32 0.0, %v563
        %v565 = vpop.f32.mrb[0].mxu0
        %v566 = vpop.f32.mrb[0].mxu0
        %v567 = vadd.f32 0.0, %v566
        %v568 = vpop.f32.mrb[0].mxu0
        %569 = vmatprep.mubr.bf16.mxu0 0
        %570 = vmatmul.mubr.bf16.gmra.mrb[0].mxu0 %v445
        %v571 = vpop.f32.mrb[0].mxu0
        %v572 = vadd.f32 0.0, %v571
        %v573 = vpop.f32.mrb[0].mxu0
        %v574 = vpop.f32.mrb[0].mxu0
        %v575 = vadd.f32 0.0, %v574
        %v576 = vpop.f32.mrb[0].mxu0
        %577 = vmatprep.mubr.bf16.mxu0 0
        %578 = vmatmul.mubr.bf16.gmra.mrb[0].mxu0 %v446
        %v579 = vpop.f32.mrb[0].mxu0
        %v580 = vadd.f32 0.0, %v579
        %v581 = vpop.f32.mrb[0].mxu0
        %v582 = vpop.f32.mrb[0].mxu0
        %v583 = vadd.f32 0.0, %v582
        %v584 = vpop.f32.mrb[0].mxu0
        %585 = vmatprep.mubr.bf16.mxu0 0
        %586 = vmatmul.mubr.bf16.gmra.mrb[0].mxu0 %v447
        %v587 = vpop.f32.mrb[0].mxu0
        %v588 = vadd.f32 0.0, %v587
        %v589 = vpop.f32.mrb[0].mxu0
        %v590 = vpop.f32.mrb[0].mxu0
        %v591 = vadd.f32 0.0, %v590
        %v592 = vpop.f32.mrb[0].mxu0
        %593 = vmatprep.mubr.bf16.mxu0 0
        %594 = vmatmul.mubr.bf16.gmra.mrb[0].mxu0 %v448
        %v595 = vpop.f32.mrb[0].mxu0
        %v596 = vadd.f32 0.0, %v595
        %v597 = vpop.f32.mrb[0].mxu0
        %v598 = vpop.f32.mrb[0].mxu0
        %v599 = vadd.f32 0.0, %v598
        %v600 = vpop.f32.mrb[0].mxu0
        %601 = vdwg.mxu0
        %v602 = vadd.f32 %v361, %v540
        %v603 = vadd.f32 %v362, %v543
        %v604 = vadd.f32 %v363, %v548
        %v605 = vadd.f32 %v364, %v551
        %v606 = vadd.f32 %v365, %v556
        %v607 = vadd.f32 %v366, %v559
        %v608 = vadd.f32 %v367, %v564
        %v609 = vadd.f32 %v368, %v567
        %v610 = vadd.f32 %v369, %v572
        %v611 = vadd.f32 %v370, %v575
        %v612 = vadd.f32 %v371, %v580
        %v613 = vadd.f32 %v372, %v583
        %v614 = vadd.f32 %v373, %v588
        %v615 = vadd.f32 %v374, %v591
        %v616 = vadd.f32 %v375, %v596
        %v617 = vadd.f32 %v376, %v599
        %618 = vst [vmem:[#allocation2] sm:$0xff] %v602
        %619 = vst [vmem:[#allocation2 + $0x8] sm:$0xff] %v603
        %620 = vst [vmem:[#allocation2 + $0x10] sm:$0xff] %v604
        %621 = vst [vmem:[#allocation2 + $0x18] sm:$0xff] %v605
        %622 = vst [vmem:[#allocation2 + $0x20] sm:$0xff] %v606
        %623 = vst [vmem:[#allocation2 + $0x28] sm:$0xff] %v607
        %624 = vst [vmem:[#allocation2 + $0x30] sm:$0xff] %v608
        %625 = vst [vmem:[#allocation2 + $0x38] sm:$0xff] %v609
        %626 = vst [vmem:[#allocation2 + $0x40] sm:$0xff] %v610
        %627 = vst [vmem:[#allocation2 + $0x48] sm:$0xff] %v611
        %628 = vst [vmem:[#allocation2 + $0x50] sm:$0xff] %v612
        %629 = vst [vmem:[#allocation2 + $0x58] sm:$0xff] %v613
        %630 = vst [vmem:[#allocation2 + $0x60] sm:$0xff] %v614
        %631 = vst [vmem:[#allocation2 + $0x68] sm:$0xff] %v615
        %632 = vst [vmem:[#allocation2 + $0x70] sm:$0xff] %v616
        %633 = vst [vmem:[#allocation2 + $0x78] sm:$0xff] %v617
        %p634 = scmp.eq.s32.totalorder %s20, 1
        // Predicated region
        $region82: #{gcn2_forward.4} parent=72 // pred_check
          %p635 = pneg %p634
        $region83: #{gcn2_forward.4} parent=72 // pred_check_branch
          %637 = sbr.rel (%p635) target = $region85
        $region84: #{gcn2_forward.4} parent=72 // pred_region
          %v638 = vld [vmem:[#allocation2] sm:$0xff]
          %v639 = vld [vmem:[#allocation2 + $0x8] sm:$0xff]
          %v640 = vld [vmem:[#allocation2 + $0x10] sm:$0xff]
          %v641 = vld [vmem:[#allocation2 + $0x18] sm:$0xff]
          %v642 = vld [vmem:[#allocation2 + $0x20] sm:$0xff]
          %v643 = vld [vmem:[#allocation2 + $0x28] sm:$0xff]
          %v644 = vld [vmem:[#allocation2 + $0x30] sm:$0xff]
          %v645 = vld [vmem:[#allocation2 + $0x38] sm:$0xff]
          %v646 = vld [vmem:[#allocation2 + $0x40] sm:$0xff]
          %v647 = vld [vmem:[#allocation2 + $0x48] sm:$0xff]
          %v648 = vld [vmem:[#allocation2 + $0x50] sm:$0xff]
          %v649 = vld [vmem:[#allocation2 + $0x58] sm:$0xff]
          %v650 = vld [vmem:[#allocation2 + $0x60] sm:$0xff]
          %v651 = vld [vmem:[#allocation2 + $0x68] sm:$0xff]
          %v652 = vld [vmem:[#allocation2 + $0x70] sm:$0xff]
          %v653 = vld [vmem:[#allocation2 + $0x78] sm:$0xff]
          %v654 = vpack.c.bf16 %v639, %v638
          %v655 = vpack.c.bf16 %v641, %v640
          %v656 = vpack.c.bf16 %v643, %v642
          %v657 = vpack.c.bf16 %v645, %v644
          %v658 = vpack.c.bf16 %v647, %v646
          %v659 = vpack.c.bf16 %v649, %v648
          %v660 = vpack.c.bf16 %v651, %v650
          %v661 = vpack.c.bf16 %v653, %v652
          %v662 = vld [vmem:[%s2] sm:$0xf]
          %v663 = vld [vmem:[%s2 + $0x4] sm:$0xf]
          %v664 = vld [vmem:[%s2 + $0x8] sm:$0xf]
          %v665 = vld [vmem:[%s2 + $0xc] sm:$0xf]
          %v666 = vld [vmem:[%s2 + $0x10] sm:$0xf]
          %v667 = vld [vmem:[%s2 + $0x14] sm:$0xf]
          %v668 = vld [vmem:[%s2 + $0x18] sm:$0xf]
          %v669 = vld [vmem:[%s2 + $0x1c] sm:$0xf]
          %v670 = vld [vmem:[%s2 + $0x20] sm:$0xf]
          %v671 = vld [vmem:[%s2 + $0x24] sm:$0xf]
          %v672 = vld [vmem:[%s2 + $0x28] sm:$0xf]
          %v673 = vld [vmem:[%s2 + $0x2c] sm:$0xf]
          %v674 = vld [vmem:[%s2 + $0x30] sm:$0xf]
          %v675 = vld [vmem:[%s2 + $0x34] sm:$0xf]
          %v676 = vld [vmem:[%s2 + $0x38] sm:$0xf]
          %v677 = vld [vmem:[%s2 + $0x3c] sm:$0xf]
          %v678 = vld [vmem:[%s3] sm:$0x1]
          %v680 = vlaneseq
          %v681 = vshrl.u32 %v680, 7
          %v682 = vsub.s32 0, %v681
          %v683 = vrot.slane %v678, %v682
          %v701 = vunpack.c.l.b16 %v662
          %v702 = vunpack.c.l.b16 %v663
          %v703 = vunpack.c.l.b16 %v664
          %v704 = vunpack.c.l.b16 %v665
          %v705 = vunpack.c.l.b16 %v666
          %v706 = vunpack.c.l.b16 %v667
          %v707 = vunpack.c.l.b16 %v668
          %v708 = vunpack.c.l.b16 %v669
          %v709 = vunpack.c.l.b16 %v670
          %v710 = vunpack.c.l.b16 %v671
          %v711 = vunpack.c.l.b16 %v672
          %v712 = vunpack.c.l.b16 %v673
          %v713 = vunpack.c.l.b16 %v674
          %v714 = vunpack.c.l.b16 %v675
          %v715 = vunpack.c.l.b16 %v676
          %v716 = vunpack.c.l.b16 %v677
          %v717 = vpack.c.b16 %v702, %v701
          %v718 = vpack.c.b16 %v704, %v703
          %v719 = vpack.c.b16 %v706, %v705
          %v720 = vpack.c.b16 %v708, %v707
          %v721 = vpack.c.b16 %v710, %v709
          %v722 = vpack.c.b16 %v712, %v711
          %v723 = vpack.c.b16 %v714, %v713
          %v724 = vpack.c.b16 %v716, %v715
          %733 = vmatprep.subr.bf16.mxu0 0
          %734 = vmatpush1.bf16.msra.mxu0 %v717
          %735 = vmatprep.subr.bf16.mxu0 0
          %736 = vmatpush1.bf16.msra.mxu0 %v718
          %737 = vmatprep.subr.bf16.mxu0 0
          %738 = vmatpush1.bf16.msra.mxu0 %v719
          %739 = vmatprep.subr.bf16.mxu0 0
          %740 = vmatpush1.bf16.msra.mxu0 %v720
          %741 = vmatprep.subr.bf16.mxu0 0
          %742 = vmatpush1.bf16.msra.mxu0 %v721
          %743 = vmatprep.subr.bf16.mxu0 0
          %744 = vmatpush1.bf16.msra.mxu0 %v722
          %745 = vmatprep.subr.bf16.mxu0 0
          %746 = vmatpush1.bf16.msra.mxu0 %v723
          %747 = vmatprep.subr.bf16.mxu0 0
          %748 = vmatpush1.bf16.msra.mxu0 %v724
          %749 = vmatprep.subr.bf16.mxu0 0
          %750 = vmatpush1.bf16.msra.mxu0 0
          %751 = vmatprep.subr.bf16.mxu0 0
          %752 = vmatpush1.bf16.msra.mxu0 0
          %753 = vmatprep.subr.bf16.mxu0 0
          %754 = vmatpush1.bf16.msra.mxu0 0
          %755 = vmatprep.subr.bf16.mxu0 0
          %756 = vmatpush1.bf16.msra.mxu0 0
          %757 = vmatprep.subr.bf16.mxu0 0
          %758 = vmatpush1.bf16.msra.mxu0 0
          %759 = vmatprep.subr.bf16.mxu0 0
          %760 = vmatpush1.bf16.msra.mxu0 0
          %761 = vmatprep.subr.bf16.mxu0 0
          %762 = vmatpush1.bf16.msra.mxu0 0
          %763 = vmatprep.subr.bf16.mxu0 0
          %764 = vmatpush1.bf16.msra.mxu0 0
          %765 = vmatprep.mubr.bf16.mxu0 0
          %766 = vmatmul.mubr.bf16.gmra.mrb[0].mxu0 %v654
          %v767 = vpop.f32.mrb[0].mxu0
          %v768 = vadd.f32 %v683, %v767
          %v769 = vpop.f32.mrb[0].mxu0
          %v770 = vpop.f32.mrb[0].mxu0
          %v771 = vadd.f32 %v683, %v770
          %v772 = vpop.f32.mrb[0].mxu0
          %773 = vmatprep.mubr.bf16.mxu0 0
          %774 = vmatmul.mubr.bf16.gmra.mrb[0].mxu0 %v655
          %v775 = vpop.f32.mrb[0].mxu0
          %v776 = vadd.f32 %v683, %v775
          %v777 = vpop.f32.mrb[0].mxu0
          %v778 = vpop.f32.mrb[0].mxu0
          %v779 = vadd.f32 %v683, %v778
          %v780 = vpop.f32.mrb[0].mxu0
          %781 = vmatprep.mubr.bf16.mxu0 0
          %782 = vmatmul.mubr.bf16.gmra.mrb[0].mxu0 %v656
          %v783 = vpop.f32.mrb[0].mxu0
          %v784 = vadd.f32 %v683, %v783
          %v785 = vpop.f32.mrb[0].mxu0
          %v786 = vpop.f32.mrb[0].mxu0
          %v787 = vadd.f32 %v683, %v786
          %v788 = vpop.f32.mrb[0].mxu0
          %789 = vmatprep.mubr.bf16.mxu0 0
          %790 = vmatmul.mubr.bf16.gmra.mrb[0].mxu0 %v657
          %v791 = vpop.f32.mrb[0].mxu0
          %v792 = vadd.f32 %v683, %v791
          %v793 = vpop.f32.mrb[0].mxu0
          %v794 = vpop.f32.mrb[0].mxu0
          %v795 = vadd.f32 %v683, %v794
          %v796 = vpop.f32.mrb[0].mxu0
          %797 = vmatprep.mubr.bf16.mxu0 0
          %798 = vmatmul.mubr.bf16.gmra.mrb[0].mxu0 %v658
          %v799 = vpop.f32.mrb[0].mxu0
          %v800 = vadd.f32 %v683, %v799
          %v801 = vpop.f32.mrb[0].mxu0
          %v802 = vpop.f32.mrb[0].mxu0
          %v803 = vadd.f32 %v683, %v802
          %v804 = vpop.f32.mrb[0].mxu0
          %805 = vmatprep.mubr.bf16.mxu0 0
          %806 = vmatmul.mubr.bf16.gmra.mrb[0].mxu0 %v659
          %v807 = vpop.f32.mrb[0].mxu0
          %v808 = vadd.f32 %v683, %v807
          %v809 = vpop.f32.mrb[0].mxu0
          %v810 = vpop.f32.mrb[0].mxu0
          %v811 = vadd.f32 %v683, %v810
          %v812 = vpop.f32.mrb[0].mxu0
          %813 = vmatprep.mubr.bf16.mxu0 0
          %814 = vmatmul.mubr.bf16.gmra.mrb[0].mxu0 %v660
          %v815 = vpop.f32.mrb[0].mxu0
          %v816 = vadd.f32 %v683, %v815
          %v817 = vpop.f32.mrb[0].mxu0
          %v818 = vpop.f32.mrb[0].mxu0
          %v819 = vadd.f32 %v683, %v818
          %v820 = vpop.f32.mrb[0].mxu0
          %821 = vmatprep.mubr.bf16.mxu0 0
          %822 = vmatmul.mubr.bf16.gmra.mrb[0].mxu0 %v661
          %v823 = vpop.f32.mrb[0].mxu0
          %v824 = vadd.f32 %v683, %v823
          %v825 = vpop.f32.mrb[0].mxu0
          %v826 = vpop.f32.mrb[0].mxu0
          %v827 = vadd.f32 %v683, %v826
          %v828 = vpop.f32.mrb[0].mxu0
          %829 = vdwg.mxu0
          %v830 = vmax.f32 %v768, 0.0
          %v831 = vmax.f32 %v771, 0.0
          %v832 = vmax.f32 %v776, 0.0
          %v833 = vmax.f32 %v779, 0.0
          %v834 = vmax.f32 %v784, 0.0
          %v835 = vmax.f32 %v787, 0.0
          %v836 = vmax.f32 %v792, 0.0
          %v837 = vmax.f32 %v795, 0.0
          %v838 = vmax.f32 %v800, 0.0
          %v839 = vmax.f32 %v803, 0.0
          %v840 = vmax.f32 %v808, 0.0
          %v841 = vmax.f32 %v811, 0.0
          %v842 = vmax.f32 %v816, 0.0
          %v843 = vmax.f32 %v819, 0.0
          %v844 = vmax.f32 %v824, 0.0
          %v845 = vmax.f32 %v827, 0.0
          %v846 = vpack.c.bf16 %v831, %v830
          %v847 = vpack.c.bf16 %v833, %v832
          %v848 = vpack.c.bf16 %v835, %v834
          %v849 = vpack.c.bf16 %v837, %v836
          %v850 = vpack.c.bf16 %v839, %v838
          %v851 = vpack.c.bf16 %v841, %v840
          %v852 = vpack.c.bf16 %v843, %v842
          %v853 = vpack.c.bf16 %v845, %v844
          %v862 = vunpack.c.l.b16 %v846
          %v863 = vunpack.c.h.b16 %v846
          %v864 = vunpack.c.l.b16 %v847
          %v865 = vunpack.c.h.b16 %v847
          %v866 = vunpack.c.l.b16 %v848
          %v867 = vunpack.c.h.b16 %v848
          %v868 = vunpack.c.l.b16 %v849
          %v869 = vunpack.c.h.b16 %v849
          %v870 = vunpack.c.l.b16 %v850
          %v871 = vunpack.c.h.b16 %v850
          %v872 = vunpack.c.l.b16 %v851
          %v873 = vunpack.c.h.b16 %v851
          %v874 = vunpack.c.l.b16 %v852
          %v875 = vunpack.c.h.b16 %v852
          %v876 = vunpack.c.l.b16 %v853
          %v877 = vunpack.c.h.b16 %v853
          %v878 = vpack.c.b16 %v862, %v862
          %v879 = vpack.c.b16 %v863, %v863
          %v880 = vpack.c.b16 %v864, %v864
          %v881 = vpack.c.b16 %v865, %v865
          %v882 = vpack.c.b16 %v866, %v866
          %v883 = vpack.c.b16 %v867, %v867
          %v884 = vpack.c.b16 %v868, %v868
          %v885 = vpack.c.b16 %v869, %v869
          %v886 = vpack.c.b16 %v870, %v870
          %v887 = vpack.c.b16 %v871, %v871
          %v888 = vpack.c.b16 %v872, %v872
          %v889 = vpack.c.b16 %v873, %v873
          %v890 = vpack.c.b16 %v874, %v874
          %v891 = vpack.c.b16 %v875, %v875
          %v892 = vpack.c.b16 %v876, %v876
          %v893 = vpack.c.b16 %v877, %v877
          %910 = vst [vmem:[%s338] sm:$0xf] %v878
          %911 = vst [vmem:[%s338 + $0x4] sm:$0xf] %v879
          %912 = vst [vmem:[%s338 + $0x8] sm:$0xf] %v880
          %913 = vst [vmem:[%s338 + $0xc] sm:$0xf] %v881
          %914 = vst [vmem:[%s338 + $0x10] sm:$0xf] %v882
          %915 = vst [vmem:[%s338 + $0x14] sm:$0xf] %v883
          %916 = vst [vmem:[%s338 + $0x18] sm:$0xf] %v884
          %917 = vst [vmem:[%s338 + $0x1c] sm:$0xf] %v885
          %918 = vst [vmem:[%s338 + $0x20] sm:$0xf] %v886
          %919 = vst [vmem:[%s338 + $0x24] sm:$0xf] %v887
          %920 = vst [vmem:[%s338 + $0x28] sm:$0xf] %v888
          %921 = vst [vmem:[%s338 + $0x2c] sm:$0xf] %v889
          %922 = vst [vmem:[%s338 + $0x30] sm:$0xf] %v890
          %923 = vst [vmem:[%s338 + $0x34] sm:$0xf] %v891
          %924 = vst [vmem:[%s338 + $0x38] sm:$0xf] %v892
          %925 = vst [vmem:[%s338 + $0x3c] sm:$0xf] %v893
        $region85: #{gcn2_forward.4} parent=72 // pred_fallthru
          _
        %s926 = smul.u32 16, %s19
        %p927 = scmp.lt.s32.totalorder %s926, 31
        %s928 = scalar_select %p927, %s926, 31
        %s929 = smul.addr %s928, 4
        %s930 = scalar_lea.vmem %s4, %s929
        // Predicated region
        $region86: #{gcn2_forward.4} parent=72 // pred_check
          %p931 = pneg %p141
        $region87: #{gcn2_forward.4} parent=72 // pred_check_branch
          %933 = sbr.rel (%p931) target = $region89
        $region88: #{gcn2_forward.4} parent=72 // pred_region
          %s934 = smul.u32 16, %s19
        $region89: #{gcn2_forward.4} parent=72 // pred_fallthru
          _
      $region73: #{gcn2_forward.4} parent=5 // pred_fallthru
        _
      %p935 = scmp.le.s32.totalorder 2, %s10
      // Predicated region
      $region90: #{gcn2_forward.4} parent=5 // pred_check
        %p936 = pneg %p935
      $region91: #{gcn2_forward.4} parent=5 // pred_check_branch
        %938 = sbr.rel (%p936) target = $region93
      $region92: #{gcn2_forward.4} parent=5 // pred_region
        %s939 = ssub.s32 %s10, 2
        // Predicated region
        $region94: #{gcn2_forward.4} parent=92 // pred_check
          %p940 = pneg %p147
        $region95: #{gcn2_forward.4} parent=92 // pred_check_branch
          %942 = sbr.rel (%p940) target = $region97
        $region96: #{gcn2_forward.4} parent=92 // pred_region
          %s943 = smul.u32 16, %s21
          %p944 = scmp.lt.s32.totalorder %s943, 31
          %s945 = scalar_select %p944, %s943, 31
          %s946 = smul.addr %s945, 4
          %s947 = scalar_lea.vmem %s4, %s946
        $region97: #{gcn2_forward.4} parent=92 // pred_fallthru
          _
      $region93: #{gcn2_forward.4} parent=5 // pred_fallthru
        _
    $region6: #{gcn2_forward.4} parent=1 // loop_footer
      %s14 = sadd.s32 1, %s10
    $region7: #{gcn2_forward.4} parent=1 // loop_footer_branch
      %9 = sbr.rel target = $region3
    $region8: #{gcn2_forward.4} parent=1 // loop_exit
      _

// kernel: gcn2_forward.6
$region0: #{gcn2_forward.6}
  #allocation0 [shape = 'u32[]', space=smem, size = 0x4, offset = 0x4, fixed_abs, tag = 'smem constant byte address 0x4 - core index']
  #allocation1 [shape = 'u32[144,128]{1,0:T(1,128)}', space=vmem, size = 0x12000, scoped, tag = 'internal scratch']
  #allocation2 [shape = 'f32[128,128]{1,0:T(8,128)}', space=vmem, size = 0x10000, scoped, tag = 'scratch operand']
  %s0 = inlined_call_operand.vmem [shape: bf16[256,256], index: 0, kind: input, shape index: {}]
  %s1 = inlined_call_operand.vmem [shape: bf16[256,128], index: 1, kind: input, shape index: {}]
  %s2 = inlined_call_operand.vmem [shape: bf16[128,128], index: 2, kind: input, shape index: {}]
  %s3 = inlined_call_operand.vmem [shape: f32[1,128], index: 3, kind: input, shape index: {}]
  %s4 = inlined_call_operand.vmem [shape: bf16[256,128], index: 4, kind: output, shape index: {}]
  %s5 = sld [smem:[#allocation0]]
  $region98: #{gcn2_forward.6} parent=0
    _
  %s7 = ssub.s32 1, %s5
  %s8 = scalar_select 0, %s7, %s5
  $region1: #{gcn2_forward.6} parent=0
    #allocation3 [shape = 'u8[65536]{0}', space=vmem, size = 0x10000, scoped, tag = 'input window, operand 0']
    loop: start=0, step=1, limit=6
    $region2: #{gcn2_forward.6} parent=1 // loop_pre_header
      _
    $region3: #{gcn2_forward.6} parent=1 // loop_header
      %s10 = sphi 0, %s14
      %p11 = scmp.ge.s32.totalorder %s10, 6
      %s17 = sphi 0, %s29
      %s18 = sphi 0, %s25
      %s19 = sphi 0, %s17
      %s20 = sphi 0, %s18
      %s21 = sphi 0, %s19
      %s22 = sphi 0, %s20
      %s34 = sphi 0, %s36
      %s37 = sphi 0, %s34
      %s38 = sphi 0, %s37
      %s54 = sphi 0, %s38
      %s60 = sphi 0, %s62
      %s63 = sphi 0, %s60
      %s64 = sphi 0, %s63
      %s80 = sphi 0, %s64
      %s84 = sphi 0, %s84
      %s86 = sphi 0, %s84
      %s87 = sphi 0, %s86
      %s101 = sphi 0, %s87
      %s105 = sphi 0, %s105
      %s107 = sphi 0, %s105
      %s108 = sphi 0, %s107
      %s122 = sphi 0, %s108
      %s128 = sphi 0, %s130
      %s131 = sphi 0, %s128
      %s132 = sphi 0, %s131
      %s148 = sphi 0, %s132
    $region4: #{gcn2_forward.6} parent=1 // loop_header_branch
      %13 = sbr.rel (%p11) target = $region8
    $region5: #{gcn2_forward.6} parent=1 // loop_body
      %s15 = ssub.s32 %s10, 1
      %s16 = ssub.s32 %s10, 2
      %s23 = sadd.s32 1, %s18
      %p24 = scmp.ge.s32.totalorder %s23, 2
      %s25 = scalar_select %p24, 0, %s23
      %s26 = sadd.s32 1, %s17
      %s27 = scalar_select %p24, %s26, %s17
      %p28 = scmp.ge.s32.totalorder %s27, 2
      %s29 = scalar_select %p28, 0, %s27
      %s30 = ssub.s32 %s17, %s29
      %s31 = ssub.s32 %s18, %s25
      %s32 = sor.u32 %s30, %s31
      %p33 = scmp.eq.s32.totalorder %s32, 0
      %s35 = sadd.s32 %s34, 1
      %s36 = scalar_select %p33, %s34, %s35
      %p39 = pneg %p33
      %p40 = scmp.eq.s32.totalorder %s10, 3
      %p41 = por %p39, %p40
      %p42 = scmp.ne.s32.totalorder %s34, %s37
      %p43 = scmp.eq.s32.totalorder %s10, 0
      %p44 = por %p42, %p43
      %p45 = scmp.ne.s32.totalorder %s34, %s37
      %p46 = scmp.eq.s32.totalorder %s15, 3
      %p47 = por %p45, %p46
      %p48 = scmp.ne.s32.totalorder %s37, %s38
      %p49 = scmp.eq.s32.totalorder %s15, 0
      %p50 = por %p48, %p49
      %p51 = scmp.ne.s32.totalorder %s37, %s38
      %p52 = scmp.eq.s32.totalorder %s16, 3
      %p53 = por %p51, %p52
      %p55 = scmp.ne.s32.totalorder %s38, %s54
      %p56 = scmp.eq.s32.totalorder %s16, 0
      %p57 = por %p55, %p56
      %s58 = ssub.s32 %s18, %s25
      %p59 = scmp.eq.s32.totalorder %s58, 0
      %s61 = sadd.s32 %s60, 1
      %s62 = scalar_select %p59, %s60, %s61
      %p65 = pneg %p59
      %p66 = scmp.eq.s32.totalorder %s10, 3
      %p67 = por %p65, %p66
      %p68 = scmp.ne.s32.totalorder %s60, %s63
      %p69 = scmp.eq.s32.totalorder %s10, 0
      %p70 = por %p68, %p69
      %p71 = scmp.ne.s32.totalorder %s60, %s63
      %p72 = scmp.eq.s32.totalorder %s15, 3
      %p73 = por %p71, %p72
      %p74 = scmp.ne.s32.totalorder %s63, %s64
      %p75 = scmp.eq.s32.totalorder %s15, 0
      %p76 = por %p74, %p75
      %p77 = scmp.ne.s32.totalorder %s63, %s64
      %p78 = scmp.eq.s32.totalorder %s16, 3
      %p79 = por %p77, %p78
      %p81 = scmp.ne.s32.totalorder %s64, %s80
      %p82 = scmp.eq.s32.totalorder %s16, 0
      %p83 = por %p81, %p82
      %s85 = sadd.s32 %s84, 1
      %p88 = scmp.eq.s32.totalorder %s10, 3
      %p89 = scmp.ne.s32.totalorder %s84, %s86
      %p90 = scmp.eq.s32.totalorder %s10, 0
      %p91 = por %p89, %p90
      %p92 = scmp.ne.s32.totalorder %s84, %s86
      %p93 = scmp.eq.s32.totalorder %s15, 3
      %p94 = por %p92, %p93
      %p95 = scmp.ne.s32.totalorder %s86, %s87
      %p96 = scmp.eq.s32.totalorder %s15, 0
      %p97 = por %p95, %p96
      %p98 = scmp.ne.s32.totalorder %s86, %s87
      %p99 = scmp.eq.s32.totalorder %s16, 3
      %p100 = por %p98, %p99
      %p102 = scmp.ne.s32.totalorder %s87, %s101
      %p103 = scmp.eq.s32.totalorder %s16, 0
      %p104 = por %p102, %p103
      %s106 = sadd.s32 %s105, 1
      %p109 = scmp.eq.s32.totalorder %s10, 3
      %p110 = scmp.ne.s32.totalorder %s105, %s107
      %p111 = scmp.eq.s32.totalorder %s10, 0
      %p112 = por %p110, %p111
      %p113 = scmp.ne.s32.totalorder %s105, %s107
      %p114 = scmp.eq.s32.totalorder %s15, 3
      %p115 = por %p113, %p114
      %p116 = scmp.ne.s32.totalorder %s107, %s108
      %p117 = scmp.eq.s32.totalorder %s15, 0
      %p118 = por %p116, %p117
      %p119 = scmp.ne.s32.totalorder %s107, %s108
      %p120 = scmp.eq.s32.totalorder %s16, 3
      %p121 = por %p119, %p120
      %p123 = scmp.ne.s32.totalorder %s108, %s122
      %p124 = scmp.eq.s32.totalorder %s16, 0
      %p125 = por %p123, %p124
      %s126 = ssub.s32 %s17, %s29
      %p127 = scmp.eq.s32.totalorder %s126, 0
      %s129 = sadd.s32 %s128, 1
      %s130 = scalar_select %p127, %s128, %s129
      %p133 = pneg %p127
      %p134 = scmp.eq.s32.totalorder %s10, 3
      %p135 = por %p133, %p134
      %p136 = scmp.ne.s32.totalorder %s128, %s131
      %p137 = scmp.eq.s32.totalorder %s10, 0
      %p138 = por %p136, %p137
      %p139 = scmp.ne.s32.totalorder %s128, %s131
      %p140 = scmp.eq.s32.totalorder %s15, 3
      %p141 = por %p139, %p140
      %p142 = scmp.ne.s32.totalorder %s131, %s132
      %p143 = scmp.eq.s32.totalorder %s15, 0
      %p144 = por %p142, %p143
      %p145 = scmp.ne.s32.totalorder %s131, %s132
      %p146 = scmp.eq.s32.totalorder %s16, 3
      %p147 = por %p145, %p146
      %p149 = scmp.ne.s32.totalorder %s132, %s148
      %p150 = scmp.eq.s32.totalorder %s16, 0
      %p151 = por %p149, %p150
      %p152 = scmp.le.s32.totalorder 1, %s10
      %p153 = scmp.lt.s32.totalorder %s10, 5
      %p154 = pnand %p152, %p153
      %p155 = pneg %p154
      // Predicated region
      $region9: #{gcn2_forward.6} parent=5 // pred_check
        _
      $region10: #{gcn2_forward.6} parent=5 // pred_check_branch
        %157 = sbr.rel (%p154) target = $region12
      $region11: #{gcn2_forward.6} parent=5 // pred_region
        %s158 = ssub.s32 %s10, 1
        // Predicated region
        $region13: #{gcn2_forward.6} parent=11 // pred_check
          %p159 = pneg %p97
        $region14: #{gcn2_forward.6} parent=11 // pred_check_branch
          %161 = sbr.rel (%p159) target = $region16
        $region15: #{gcn2_forward.6} parent=11 // pred_region
          _
        $region16: #{gcn2_forward.6} parent=11 // pred_fallthru
          _
        // Predicated region
        $region17: #{gcn2_forward.6} parent=11 // pred_check
          %p162 = pneg %p118
        $region18: #{gcn2_forward.6} parent=11 // pred_check_branch
          %164 = sbr.rel (%p162) target = $region20
        $region19: #{gcn2_forward.6} parent=11 // pred_region
          _
        $region20: #{gcn2_forward.6} parent=11 // pred_fallthru
          _
      $region12: #{gcn2_forward.6} parent=5 // pred_fallthru
        _
      %p165 = scmp.lt.s32.totalorder %s10, 4
      // Predicated region
      $region21: #{gcn2_forward.6} parent=5 // pred_check
        %p166 = pneg %p165
      $region22: #{gcn2_forward.6} parent=5 // pred_check_branch
        %168 = sbr.rel (%p166) target = $region24
      $region23: #{gcn2_forward.6} parent=5 // pred_region
        // Predicated region
        $region25: #{gcn2_forward.6} parent=23 // pred_check
          %p169 = pneg %p44
        $region26: #{gcn2_forward.6} parent=23 // pred_check_branch
          %171 = sbr.rel (%p169) target = $region28
        $region27: #{gcn2_forward.6} parent=23 // pred_region
          %s172 = sand.u32 %s34, 1
          %s173 = sand.u32 %s34, 1
          %s174 = smul.addr %s173, 64
          %s175 = scalar_lea.vmem [#allocation3], %s174
          %s176 = smul.u32 16, %s17
          %s177 = smul.addr %s176, 2
          %s178 = sadd.s32 %s18, %s177
          %s179 = smul.addr %s178, 4
          %s180 = scalar_lea.vmem %s0, %s179
          // Predicated region
          $region29: #{gcn2_forward.6} parent=27 // pred_check
            _
          $region30: #{gcn2_forward.6} parent=27 // pred_check_branch
            %182 = sbr.rel (0) target = $region32
          $region31: #{gcn2_forward.6} parent=27 // pred_region
            // Predicated region
            $region33: #{gcn2_forward.6} parent=31 // pred_check
              _
            $region34: #{gcn2_forward.6} parent=31 // pred_check_branch
              %184 = sbr.rel target = $region36
            $region35: #{gcn2_forward.6} parent=31 // pred_region
              // Predicated region
              $region48: #{gcn2_forward.6} parent=35 // pred_check
                _
              $region49: #{gcn2_forward.6} parent=35 // pred_check_branch
                %229 = sbr.rel (0) target = $region51
              $region50: #{gcn2_forward.6} parent=35 // pred_region
                loop: start=0, step=1, limit=1
                $region52: #{gcn2_forward.6} parent=50 // loop_pre_header
                  _
                $region53: #{gcn2_forward.6} parent=50 // loop_header
                  %s231 = sphi 0, %s235
                  %p232 = scmp.ge.s32.totalorder %s231, 1
                  %s236 = sphi %s180, %s180
                  %s237 = sphi %s175, %s175
                $region54: #{gcn2_forward.6} parent=50 // loop_header_branch
                  %234 = sbr.rel (%p232) target = $region58
                $region55: #{gcn2_forward.6} parent=50 // loop_body
                  _
                $region56: #{gcn2_forward.6} parent=50 // loop_footer
                  %s235 = sadd.s32 1, %s231
                $region57: #{gcn2_forward.6} parent=50 // loop_footer_branch
                  %230 = sbr.rel target = $region53
                $region58: #{gcn2_forward.6} parent=50 // loop_exit
                  _
                loop: start=0, step=1, limit=1
                $region59: #{gcn2_forward.6} parent=50 // loop_pre_header
                  _
                $region60: #{gcn2_forward.6} parent=50 // loop_header
                  %s240 = sphi 0, %s244
                  %p241 = scmp.ge.s32.totalorder %s240, 1
                  %s245 = sphi %s180, %s180
                  %s246 = sphi %s175, %s175
                $region61: #{gcn2_forward.6} parent=50 // loop_header_branch
                  %243 = sbr.rel (%p241) target = $region65
                $region62: #{gcn2_forward.6} parent=50 // loop_body
                  %v247 = vld [vmem:[%s245] sm:$0xf]
                  %248 = vst [vmem:[%s246] sm:$0xf] %v247
                  %v249 = vld [vmem:[%s245 + $0x8] sm:$0xf]
                  %250 = vst [vmem:[%s246 + $0x4] sm:$0xf] %v249
                  %v251 = vld [vmem:[%s245 + $0x10] sm:$0xf]
                  %252 = vst [vmem:[%s246 + $0x8] sm:$0xf] %v251
                  %v253 = vld [vmem:[%s245 + $0x18] sm:$0xf]
                  %254 = vst [vmem:[%s246 + $0xc] sm:$0xf] %v253
                  %v255 = vld [vmem:[%s245 + $0x20] sm:$0xf]
                  %256 = vst [vmem:[%s246 + $0x10] sm:$0xf] %v255
                  %v257 = vld [vmem:[%s245 + $0x28] sm:$0xf]
                  %258 = vst [vmem:[%s246 + $0x14] sm:$0xf] %v257
                  %v259 = vld [vmem:[%s245 + $0x30] sm:$0xf]
                  %260 = vst [vmem:[%s246 + $0x18] sm:$0xf] %v259
                  %v261 = vld [vmem:[%s245 + $0x38] sm:$0xf]
                  %262 = vst [vmem:[%s246 + $0x1c] sm:$0xf] %v261
                  %v263 = vld [vmem:[%s245 + $0x40] sm:$0xf]
                  %264 = vst [vmem:[%s246 + $0x20] sm:$0xf] %v263
                  %v265 = vld [vmem:[%s245 + $0x48] sm:$0xf]
                  %266 = vst [vmem:[%s246 + $0x24] sm:$0xf] %v265
                  %v267 = vld [vmem:[%s245 + $0x50] sm:$0xf]
                  %268 = vst [vmem:[%s246 + $0x28] sm:$0xf] %v267
                  %v269 = vld [vmem:[%s245 + $0x58] sm:$0xf]
                  %270 = vst [vmem:[%s246 + $0x2c] sm:$0xf] %v269
                  %v271 = vld [vmem:[%s245 + $0x60] sm:$0xf]
                  %272 = vst [vmem:[%s246 + $0x30] sm:$0xf] %v271
                  %v273 = vld [vmem:[%s245 + $0x68] sm:$0xf]
                  %274 = vst [vmem:[%s246 + $0x34] sm:$0xf] %v273
                  %v275 = vld [vmem:[%s245 + $0x70] sm:$0xf]
                  %276 = vst [vmem:[%s246 + $0x38] sm:$0xf] %v275
                  %v277 = vld [vmem:[%s245 + $0x78] sm:$0xf]
                  %278 = vst [vmem:[%s246 + $0x3c] sm:$0xf] %v277
                $region63: #{gcn2_forward.6} parent=50 // loop_footer
                  %s244 = sadd.s32 1, %s240
                $region64: #{gcn2_forward.6} parent=50 // loop_footer_branch
                  %239 = sbr.rel target = $region60
                $region65: #{gcn2_forward.6} parent=50 // loop_exit
                  _
              $region51: #{gcn2_forward.6} parent=35 // pred_fallthru
                _
            $region36: #{gcn2_forward.6} parent=31 // pred_fallthru
              _
            // Predicated region
            $region37: #{gcn2_forward.6} parent=31 // pred_check
              _
            $region38: #{gcn2_forward.6} parent=31 // pred_check_branch
              %186 = sbr.rel (0) target = $region40
            $region39: #{gcn2_forward.6} parent=31 // pred_region
              loop: start=0, step=1, limit=1
              $region41: #{gcn2_forward.6} parent=39 // loop_pre_header
                _
              $region42: #{gcn2_forward.6} parent=39 // loop_header
                %s189 = sphi 0, %s193
                %p190 = scmp.ge.s32.totalorder %s189, 1
                %s194 = sphi %s180, %s180
                %s195 = sphi %s175, %s175
              $region43: #{gcn2_forward.6} parent=39 // loop_header_branch
                %192 = sbr.rel (%p190) target = $region47
              $region44: #{gcn2_forward.6} parent=39 // loop_body
                %v196 = vld [vmem:[%s194] sm:$0xf]
                %197 = vst [vmem:[%s195] sm:$0xf] %v196
                %v198 = vld [vmem:[%s194 + $0x8] sm:$0xf]
                %199 = vst [vmem:[%s195 + $0x4] sm:$0xf] %v198
                %v200 = vld [vmem:[%s194 + $0x10] sm:$0xf]
                %201 = vst [vmem:[%s195 + $0x8] sm:$0xf] %v200
                %v202 = vld [vmem:[%s194 + $0x18] sm:$0xf]
                %203 = vst [vmem:[%s195 + $0xc] sm:$0xf] %v202
                %v204 = vld [vmem:[%s194 + $0x20] sm:$0xf]
                %205 = vst [vmem:[%s195 + $0x10] sm:$0xf] %v204
                %v206 = vld [vmem:[%s194 + $0x28] sm:$0xf]
                %207 = vst [vmem:[%s195 + $0x14] sm:$0xf] %v206
                %v208 = vld [vmem:[%s194 + $0x30] sm:$0xf]
                %209 = vst [vmem:[%s195 + $0x18] sm:$0xf] %v208
                %v210 = vld [vmem:[%s194 + $0x38] sm:$0xf]
                %211 = vst [vmem:[%s195 + $0x1c] sm:$0xf] %v210
                %v212 = vld [vmem:[%s194 + $0x40] sm:$0xf]
                %213 = vst [vmem:[%s195 + $0x20] sm:$0xf] %v212
                %v214 = vld [vmem:[%s194 + $0x48] sm:$0xf]
                %215 = vst [vmem:[%s195 + $0x24] sm:$0xf] %v214
                %v216 = vld [vmem:[%s194 + $0x50] sm:$0xf]
                %217 = vst [vmem:[%s195 + $0x28] sm:$0xf] %v216
                %v218 = vld [vmem:[%s194 + $0x58] sm:$0xf]
                %219 = vst [vmem:[%s195 + $0x2c] sm:$0xf] %v218
                %v220 = vld [vmem:[%s194 + $0x60] sm:$0xf]
                %221 = vst [vmem:[%s195 + $0x30] sm:$0xf] %v220
                %v222 = vld [vmem:[%s194 + $0x68] sm:$0xf]
                %223 = vst [vmem:[%s195 + $0x34] sm:$0xf] %v222
                %v224 = vld [vmem:[%s194 + $0x70] sm:$0xf]
                %225 = vst [vmem:[%s195 + $0x38] sm:$0xf] %v224
                %v226 = vld [vmem:[%s194 + $0x78] sm:$0xf]
                %227 = vst [vmem:[%s195 + $0x3c] sm:$0xf] %v226
              $region45: #{gcn2_forward.6} parent=39 // loop_footer
                %s193 = sadd.s32 1, %s189
              $region46: #{gcn2_forward.6} parent=39 // loop_footer_branch
                %188 = sbr.rel target = $region42
              $region47: #{gcn2_forward.6} parent=39 // loop_exit
                _
            $region40: #{gcn2_forward.6} parent=31 // pred_fallthru
              _
          $region32: #{gcn2_forward.6} parent=27 // pred_fallthru
            _
          %279 = vnop
        $region28: #{gcn2_forward.6} parent=23 // pred_fallthru
          _
        // Predicated region
        $region66: #{gcn2_forward.6} parent=23 // pred_check
          %p280 = pneg %p70
        $region67: #{gcn2_forward.6} parent=23 // pred_check_branch
          %282 = sbr.rel (%p280) target = $region69
        $region68: #{gcn2_forward.6} parent=23 // pred_region
          %s283 = smul.u32 16, %s18
          %p284 = scmp.lt.s32.totalorder %s283, 31
          %s285 = scalar_select %p284, %s283, 31
          %s286 = smul.addr %s285, 4
          %s287 = scalar_lea.vmem %s1, %s286
          %s288 = smul.u32 16, %s18
        $region69: #{gcn2_forward.6} parent=23 // pred_fallthru
          _
      $region24: #{gcn2_forward.6} parent=5 // pred_fallthru
        _
      %p289 = scmp.le.s32.totalorder 1, %s10
      %p290 = scmp.lt.s32.totalorder %s10, 5
      %p291 = pnand %p289, %p290
      %p292 = pneg %p291
      // Predicated region
      $region70: #{gcn2_forward.6} parent=5 // pred_check
        _
      $region71: #{gcn2_forward.6} parent=5 // pred_check_branch
        %294 = sbr.rel (%p291) target = $region73
      $region72: #{gcn2_forward.6} parent=5 // pred_region
        %s295 = ssub.s32 %s10, 1
        %s296 = sand.u32 %s37, 1
        %s297 = sand.u32 %s37, 1
        %s298 = smul.addr %s297, 64
        %s299 = scalar_lea.vmem [#allocation3], %s298
        // Predicated region
        $region74: #{gcn2_forward.6} parent=72 // pred_check
          %p300 = pneg %p50
        $region75: #{gcn2_forward.6} parent=72 // pred_check_branch
          %302 = sbr.rel (%p300) target = $region77
        $region76: #{gcn2_forward.6} parent=72 // pred_region
          _
        $region77: #{gcn2_forward.6} parent=72 // pred_fallthru
          _
        %s303 = sand.u32 %s37, 1
        %s304 = sand.u32 %s37, 1
        %s305 = smul.addr %s304, 64
        %s306 = scalar_lea.vmem [#allocation3], %s305
        %p307 = pneg %p50
        %p308 = pneg %p47
        %s309 = smul.u32 16, %s20
        %p310 = scmp.lt.s32.totalorder %s309, 31
        %s311 = scalar_select %p310, %s309, 31
        %s312 = smul.addr %s311, 4
        %s313 = scalar_lea.vmem %s1, %s312
        %p314 = pneg %p76
        %p315 = pneg %p73
        %p316 = pneg %p97
        %p317 = pneg %p94
        %p318 = pneg %p118
        %p319 = pneg %p115
        %p320 = pneg %p144
        %p321 = pneg %p141
        %s322 = smul.u32 16, %s19
        %p323 = scmp.lt.s32.totalorder %s322, 31
        %s324 = scalar_select %p323, %s322, 31
        %s325 = smul.addr %s324, 4
        %s326 = scalar_lea.vmem %s4, %s325
        %s327 = smul.u32 16, %s19
        %s328 = smul.u32 16, %s20
        %p329 = scmp.lt.s32.totalorder %s328, 31
        %s330 = scalar_select %p329, %s328, 31
        %s331 = smul.addr %s330, 4
        %s332 = scalar_lea.vmem %s1, %s331
        %s333 = smul.u32 16, %s20
        %s334 = smul.u32 16, %s19
        %p335 = scmp.lt.s32.totalorder %s334, 31
        %s336 = scalar_select %p335, %s334, 31
        %s337 = smul.addr %s336, 4
        %s338 = scalar_lea.vmem %s4, %s337
        %s339 = smul.u32 16, %s19
        %p341 = scmp.eq.s32.totalorder %s20, 0
        // Predicated region
        $region78: #{gcn2_forward.6} parent=72 // pred_check
          %p342 = pneg %p341
        $region79: #{gcn2_forward.6} parent=72 // pred_check_branch
          %344 = sbr.rel (%p342) target = $region81
        $region80: #{gcn2_forward.6} parent=72 // pred_region
          %345 = vst [vmem:[#allocation2] sm:$0xff] 0.0
          %346 = vst [vmem:[#allocation2 + $0x8] sm:$0xff] 0.0
          %347 = vst [vmem:[#allocation2 + $0x10] sm:$0xff] 0.0
          %348 = vst [vmem:[#allocation2 + $0x18] sm:$0xff] 0.0
          %349 = vst [vmem:[#allocation2 + $0x20] sm:$0xff] 0.0
          %350 = vst [vmem:[#allocation2 + $0x28] sm:$0xff] 0.0
          %351 = vst [vmem:[#allocation2 + $0x30] sm:$0xff] 0.0
          %352 = vst [vmem:[#allocation2 + $0x38] sm:$0xff] 0.0
          %353 = vst [vmem:[#allocation2 + $0x40] sm:$0xff] 0.0
          %354 = vst [vmem:[#allocation2 + $0x48] sm:$0xff] 0.0
          %355 = vst [vmem:[#allocation2 + $0x50] sm:$0xff] 0.0
          %356 = vst [vmem:[#allocation2 + $0x58] sm:$0xff] 0.0
          %357 = vst [vmem:[#allocation2 + $0x60] sm:$0xff] 0.0
          %358 = vst [vmem:[#allocation2 + $0x68] sm:$0xff] 0.0
          %359 = vst [vmem:[#allocation2 + $0x70] sm:$0xff] 0.0
          %360 = vst [vmem:[#allocation2 + $0x78] sm:$0xff] 0.0
        $region81: #{gcn2_forward.6} parent=72 // pred_fallthru
          _
        %v361 = vld [vmem:[#allocation2] sm:$0xff]
        %v362 = vld [vmem:[#allocation2 + $0x8] sm:$0xff]
        %v363 = vld [vmem:[#allocation2 + $0x10] sm:$0xff]
        %v364 = vld [vmem:[#allocation2 + $0x18] sm:$0xff]
        %v365 = vld [vmem:[#allocation2 + $0x20] sm:$0xff]
        %v366 = vld [vmem:[#allocation2 + $0x28] sm:$0xff]
        %v367 = vld [vmem:[#allocation2 + $0x30] sm:$0xff]
        %v368 = vld [vmem:[#allocation2 + $0x38] sm:$0xff]
        %v369 = vld [vmem:[#allocation2 + $0x40] sm:$0xff]
        %v370 = vld [vmem:[#allocation2 + $0x48] sm:$0xff]
        %v371 = vld [vmem:[#allocation2 + $0x50] sm:$0xff]
        %v372 = vld [vmem:[#allocation2 + $0x58] sm:$0xff]
        %v373 = vld [vmem:[#allocation2 + $0x60] sm:$0xff]
        %v374 = vld [vmem:[#allocation2 + $0x68] sm:$0xff]
        %v375 = vld [vmem:[#allocation2 + $0x70] sm:$0xff]
        %v376 = vld [vmem:[#allocation2 + $0x78] sm:$0xff]
        %v377 = vld [vmem:[%s299] sm:$0xf]
        %v378 = vld [vmem:[%s299 + $0x4] sm:$0xf]
        %v379 = vld [vmem:[%s299 + $0x8] sm:$0xf]
        %v380 = vld [vmem:[%s299 + $0xc] sm:$0xf]
        %v381 = vld [vmem:[%s299 + $0x10] sm:$0xf]
        %v382 = vld [vmem:[%s299 + $0x14] sm:$0xf]
        %v383 = vld [vmem:[%s299 + $0x18] sm:$0xf]
        %v384 = vld [vmem:[%s299 + $0x1c] sm:$0xf]
        %v385 = vld [vmem:[%s299 + $0x20] sm:$0xf]
        %v386 = vld [vmem:[%s299 + $0x24] sm:$0xf]
        %v387 = vld [vmem:[%s299 + $0x28] sm:$0xf]
        %v388 = vld [vmem:[%s299 + $0x2c] sm:$0xf]
        %v389 = vld [vmem:[%s299 + $0x30] sm:$0xf]
        %v390 = vld [vmem:[%s299 + $0x34] sm:$0xf]
        %v391 = vld [vmem:[%s299 + $0x38] sm:$0xf]
        %v392 = vld [vmem:[%s299 + $0x3c] sm:$0xf]
        %v393 = vld [vmem:[%s332] sm:$0xf]
        %v394 = vld [vmem:[%s332 + $0x4] sm:$0xf]
        %v395 = vld [vmem:[%s332 + $0x8] sm:$0xf]
        %v396 = vld [vmem:[%s332 + $0xc] sm:$0xf]
        %v397 = vld [vmem:[%s332 + $0x10] sm:$0xf]
        %v398 = vld [vmem:[%s332 + $0x14] sm:$0xf]
        %v399 = vld [vmem:[%s332 + $0x18] sm:$0xf]
        %v400 = vld [vmem:[%s332 + $0x1c] sm:$0xf]
        %v401 = vld [vmem:[%s332 + $0x20] sm:$0xf]
        %v402 = vld [vmem:[%s332 + $0x24] sm:$0xf]
        %v403 = vld [vmem:[%s332 + $0x28] sm:$0xf]
        %v404 = vld [vmem:[%s332 + $0x2c] sm:$0xf]
        %v405 = vld [vmem:[%s332 + $0x30] sm:$0xf]
        %v406 = vld [vmem:[%s332 + $0x34] sm:$0xf]
        %v407 = vld [vmem:[%s332 + $0x38] sm:$0xf]
        %v408 = vld [vmem:[%s332 + $0x3c] sm:$0xf]
        %v425 = vunpack.c.l.b16 %v377
        %v426 = vunpack.c.l.b16 %v378
        %v427 = vunpack.c.l.b16 %v379
        %v428 = vunpack.c.l.b16 %v380
        %v429 = vunpack.c.l.b16 %v381
        %v430 = vunpack.c.l.b16 %v382
        %v431 = vunpack.c.l.b16 %v383
        %v432 = vunpack.c.l.b16 %v384
        %v433 = vunpack.c.l.b16 %v385
        %v434 = vunpack.c.l.b16 %v386
        %v435 = vunpack.c.l.b16 %v387
        %v436 = vunpack.c.l.b16 %v388
        %v437 = vunpack.c.l.b16 %v389
        %v438 = vunpack.c.l.b16 %v390
        %v439 = vunpack.c.l.b16 %v391
        %v440 = vunpack.c.l.b16 %v392
        %v441 = vpack.c.b16 %v426, %v425
        %v442 = vpack.c.b16 %v428, %v427
        %v443 = vpack.c.b16 %v430, %v429
        %v444 = vpack.c.b16 %v432, %v431
        %v445 = vpack.c.b16 %v434, %v433
        %v446 = vpack.c.b16 %v436, %v435
        %v447 = vpack.c.b16 %v438, %v437
        %v448 = vpack.c.b16 %v440, %v439
        %v473 = vunpack.c.l.b16 %v393
        %v474 = vunpack.c.l.b16 %v394
        %v475 = vunpack.c.l.b16 %v395
        %v476 = vunpack.c.l.b16 %v396
        %v477 = vunpack.c.l.b16 %v397
        %v478 = vunpack.c.l.b16 %v398
        %v479 = vunpack.c.l.b16 %v399
        %v480 = vunpack.c.l.b16 %v400
        %v481 = vunpack.c.l.b16 %v401
        %v482 = vunpack.c.l.b16 %v402
        %v483 = vunpack.c.l.b16 %v403
        %v484 = vunpack.c.l.b16 %v404
        %v485 = vunpack.c.l.b16 %v405
        %v486 = vunpack.c.l.b16 %v406
        %v487 = vunpack.c.l.b16 %v407
        %v488 = vunpack.c.l.b16 %v408
        %v489 = vpack.c.b16 %v474, %v473
        %v490 = vpack.c.b16 %v476, %v475
        %v491 = vpack.c.b16 %v478, %v477
        %v492 = vpack.c.b16 %v480, %v479
        %v493 = vpack.c.b16 %v482, %v481
        %v494 = vpack.c.b16 %v484, %v483
        %v495 = vpack.c.b16 %v486, %v485
        %v496 = vpack.c.b16 %v488, %v487
        %505 = vmatprep.subr.bf16.mxu0 0
        %506 = vmatpush1.bf16.msra.mxu0 %v489
        %507 = vmatprep.subr.bf16.mxu0 0
        %508 = vmatpush1.bf16.msra.mxu0 %v490
        %509 = vmatprep.subr.bf16.mxu0 0
        %510 = vmatpush1.bf16.msra.mxu0 %v491
        %511 = vmatprep.subr.bf16.mxu0 0
        %512 = vmatpush1.bf16.msra.mxu0 %v492
        %513 = vmatprep.subr.bf16.mxu0 0
        %514 = vmatpush1.bf16.msra.mxu0 %v493
        %515 = vmatprep.subr.bf16.mxu0 0
        %516 = vmatpush1.bf16.msra.mxu0 %v494
        %517 = vmatprep.subr.bf16.mxu0 0
        %518 = vmatpush1.bf16.msra.mxu0 %v495
        %519 = vmatprep.subr.bf16.mxu0 0
        %520 = vmatpush1.bf16.msra.mxu0 %v496
        %521 = vmatprep.subr.bf16.mxu0 0
        %522 = vmatpush1.bf16.msra.mxu0 0
        %523 = vmatprep.subr.bf16.mxu0 0
        %524 = vmatpush1.bf16.msra.mxu0 0
        %525 = vmatprep.subr.bf16.mxu0 0
        %526 = vmatpush1.bf16.msra.mxu0 0
        %527 = vmatprep.subr.bf16.mxu0 0
        %528 = vmatpush1.bf16.msra.mxu0 0
        %529 = vmatprep.subr.bf16.mxu0 0
        %530 = vmatpush1.bf16.msra.mxu0 0
        %531 = vmatprep.subr.bf16.mxu0 0
        %532 = vmatpush1.bf16.msra.mxu0 0
        %533 = vmatprep.subr.bf16.mxu0 0
        %534 = vmatpush1.bf16.msra.mxu0 0
        %535 = vmatprep.subr.bf16.mxu0 0
        %536 = vmatpush1.bf16.msra.mxu0 0
        %537 = vmatprep.mubr.bf16.mxu0 0
        %538 = vmatmul.mubr.bf16.gmra.mrb[0].mxu0 %v441
        %v539 = vpop.f32.mrb[0].mxu0
        %v540 = vadd.f32 0.0, %v539
        %v541 = vpop.f32.mrb[0].mxu0
        %v542 = vpop.f32.mrb[0].mxu0
        %v543 = vadd.f32 0.0, %v542
        %v544 = vpop.f32.mrb[0].mxu0
        %545 = vmatprep.mubr.bf16.mxu0 0
        %546 = vmatmul.mubr.bf16.gmra.mrb[0].mxu0 %v442
        %v547 = vpop.f32.mrb[0].mxu0
        %v548 = vadd.f32 0.0, %v547
        %v549 = vpop.f32.mrb[0].mxu0
        %v550 = vpop.f32.mrb[0].mxu0
        %v551 = vadd.f32 0.0, %v550
        %v552 = vpop.f32.mrb[0].mxu0
        %553 = vmatprep.mubr.bf16.mxu0 0
        %554 = vmatmul.mubr.bf16.gmra.mrb[0].mxu0 %v443
        %v555 = vpop.f32.mrb[0].mxu0
        %v556 = vadd.f32 0.0, %v555
        %v557 = vpop.f32.mrb[0].mxu0
        %v558 = vpop.f32.mrb[0].mxu0
        %v559 = vadd.f32 0.0, %v558
        %v560 = vpop.f32.mrb[0].mxu0
        %561 = vmatprep.mubr.bf16.mxu0 0
        %562 = vmatmul.mubr.bf16.gmra.mrb[0].mxu0 %v444
        %v563 = vpop.f32.mrb[0].mxu0
        %v564 = vadd.f32 0.0, %v563
        %v565 = vpop.f32.mrb[0].mxu0
        %v566 = vpop.f32.mrb[0].mxu0
        %v567 = vadd.f32 0.0, %v566
        %v568 = vpop.f32.mrb[0].mxu0
        %569 = vmatprep.mubr.bf16.mxu0 0
        %570 = vmatmul.mubr.bf16.gmra.mrb[0].mxu0 %v445
        %v571 = vpop.f32.mrb[0].mxu0
        %v572 = vadd.f32 0.0, %v571
        %v573 = vpop.f32.mrb[0].mxu0
        %v574 = vpop.f32.mrb[0].mxu0
        %v575 = vadd.f32 0.0, %v574
        %v576 = vpop.f32.mrb[0].mxu0
        %577 = vmatprep.mubr.bf16.mxu0 0
        %578 = vmatmul.mubr.bf16.gmra.mrb[0].mxu0 %v446
        %v579 = vpop.f32.mrb[0].mxu0
        %v580 = vadd.f32 0.0, %v579
        %v581 = vpop.f32.mrb[0].mxu0
        %v582 = vpop.f32.mrb[0].mxu0
        %v583 = vadd.f32 0.0, %v582
        %v584 = vpop.f32.mrb[0].mxu0
        %585 = vmatprep.mubr.bf16.mxu0 0
        %586 = vmatmul.mubr.bf16.gmra.mrb[0].mxu0 %v447
        %v587 = vpop.f32.mrb[0].mxu0
        %v588 = vadd.f32 0.0, %v587
        %v589 = vpop.f32.mrb[0].mxu0
        %v590 = vpop.f32.mrb[0].mxu0
        %v591 = vadd.f32 0.0, %v590
        %v592 = vpop.f32.mrb[0].mxu0
        %593 = vmatprep.mubr.bf16.mxu0 0
        %594 = vmatmul.mubr.bf16.gmra.mrb[0].mxu0 %v448
        %v595 = vpop.f32.mrb[0].mxu0
        %v596 = vadd.f32 0.0, %v595
        %v597 = vpop.f32.mrb[0].mxu0
        %v598 = vpop.f32.mrb[0].mxu0
        %v599 = vadd.f32 0.0, %v598
        %v600 = vpop.f32.mrb[0].mxu0
        %601 = vdwg.mxu0
        %v602 = vadd.f32 %v361, %v540
        %v603 = vadd.f32 %v362, %v543
        %v604 = vadd.f32 %v363, %v548
        %v605 = vadd.f32 %v364, %v551
        %v606 = vadd.f32 %v365, %v556
        %v607 = vadd.f32 %v366, %v559
        %v608 = vadd.f32 %v367, %v564
        %v609 = vadd.f32 %v368, %v567
        %v610 = vadd.f32 %v369, %v572
        %v611 = vadd.f32 %v370, %v575
        %v612 = vadd.f32 %v371, %v580
        %v613 = vadd.f32 %v372, %v583
        %v614 = vadd.f32 %v373, %v588
        %v615 = vadd.f32 %v374, %v591
        %v616 = vadd.f32 %v375, %v596
        %v617 = vadd.f32 %v376, %v599
        %618 = vst [vmem:[#allocation2] sm:$0xff] %v602
        %619 = vst [vmem:[#allocation2 + $0x8] sm:$0xff] %v603
        %620 = vst [vmem:[#allocation2 + $0x10] sm:$0xff] %v604
        %621 = vst [vmem:[#allocation2 + $0x18] sm:$0xff] %v605
        %622 = vst [vmem:[#allocation2 + $0x20] sm:$0xff] %v606
        %623 = vst [vmem:[#allocation2 + $0x28] sm:$0xff] %v607
        %624 = vst [vmem:[#allocation2 + $0x30] sm:$0xff] %v608
        %625 = vst [vmem:[#allocation2 + $0x38] sm:$0xff] %v609
        %626 = vst [vmem:[#allocation2 + $0x40] sm:$0xff] %v610
        %627 = vst [vmem:[#allocation2 + $0x48] sm:$0xff] %v611
        %628 = vst [vmem:[#allocation2 + $0x50] sm:$0xff] %v612
        %629 = vst [vmem:[#allocation2 + $0x58] sm:$0xff] %v613
        %630 = vst [vmem:[#allocation2 + $0x60] sm:$0xff] %v614
        %631 = vst [vmem:[#allocation2 + $0x68] sm:$0xff] %v615
        %632 = vst [vmem:[#allocation2 + $0x70] sm:$0xff] %v616
        %633 = vst [vmem:[#allocation2 + $0x78] sm:$0xff] %v617
        %p634 = scmp.eq.s32.totalorder %s20, 1
        // Predicated region
        $region82: #{gcn2_forward.6} parent=72 // pred_check
          %p635 = pneg %p634
        $region83: #{gcn2_forward.6} parent=72 // pred_check_branch
          %637 = sbr.rel (%p635) target = $region85
        $region84: #{gcn2_forward.6} parent=72 // pred_region
          %v638 = vld [vmem:[#allocation2] sm:$0xff]
          %v639 = vld [vmem:[#allocation2 + $0x8] sm:$0xff]
          %v640 = vld [vmem:[#allocation2 + $0x10] sm:$0xff]
          %v641 = vld [vmem:[#allocation2 + $0x18] sm:$0xff]
          %v642 = vld [vmem:[#allocation2 + $0x20] sm:$0xff]
          %v643 = vld [vmem:[#allocation2 + $0x28] sm:$0xff]
          %v644 = vld [vmem:[#allocation2 + $0x30] sm:$0xff]
          %v645 = vld [vmem:[#allocation2 + $0x38] sm:$0xff]
          %v646 = vld [vmem:[#allocation2 + $0x40] sm:$0xff]
          %v647 = vld [vmem:[#allocation2 + $0x48] sm:$0xff]
          %v648 = vld [vmem:[#allocation2 + $0x50] sm:$0xff]
          %v649 = vld [vmem:[#allocation2 + $0x58] sm:$0xff]
          %v650 = vld [vmem:[#allocation2 + $0x60] sm:$0xff]
          %v651 = vld [vmem:[#allocation2 + $0x68] sm:$0xff]
          %v652 = vld [vmem:[#allocation2 + $0x70] sm:$0xff]
          %v653 = vld [vmem:[#allocation2 + $0x78] sm:$0xff]
          %v654 = vpack.c.bf16 %v639, %v638
          %v655 = vpack.c.bf16 %v641, %v640
          %v656 = vpack.c.bf16 %v643, %v642
          %v657 = vpack.c.bf16 %v645, %v644
          %v658 = vpack.c.bf16 %v647, %v646
          %v659 = vpack.c.bf16 %v649, %v648
          %v660 = vpack.c.bf16 %v651, %v650
          %v661 = vpack.c.bf16 %v653, %v652
          %v662 = vld [vmem:[%s2] sm:$0xf]
          %v663 = vld [vmem:[%s2 + $0x4] sm:$0xf]
          %v664 = vld [vmem:[%s2 + $0x8] sm:$0xf]
          %v665 = vld [vmem:[%s2 + $0xc] sm:$0xf]
          %v666 = vld [vmem:[%s2 + $0x10] sm:$0xf]
          %v667 = vld [vmem:[%s2 + $0x14] sm:$0xf]
          %v668 = vld [vmem:[%s2 + $0x18] sm:$0xf]
          %v669 = vld [vmem:[%s2 + $0x1c] sm:$0xf]
          %v670 = vld [vmem:[%s2 + $0x20] sm:$0xf]
          %v671 = vld [vmem:[%s2 + $0x24] sm:$0xf]
          %v672 = vld [vmem:[%s2 + $0x28] sm:$0xf]
          %v673 = vld [vmem:[%s2 + $0x2c] sm:$0xf]
          %v674 = vld [vmem:[%s2 + $0x30] sm:$0xf]
          %v675 = vld [vmem:[%s2 + $0x34] sm:$0xf]
          %v676 = vld [vmem:[%s2 + $0x38] sm:$0xf]
          %v677 = vld [vmem:[%s2 + $0x3c] sm:$0xf]
          %v678 = vld [vmem:[%s3] sm:$0x1]
          %v680 = vlaneseq
          %v681 = vshrl.u32 %v680, 7
          %v682 = vsub.s32 0, %v681
          %v683 = vrot.slane %v678, %v682
          %v701 = vunpack.c.l.b16 %v662
          %v702 = vunpack.c.l.b16 %v663
          %v703 = vunpack.c.l.b16 %v664
          %v704 = vunpack.c.l.b16 %v665
          %v705 = vunpack.c.l.b16 %v666
          %v706 = vunpack.c.l.b16 %v667
          %v707 = vunpack.c.l.b16 %v668
          %v708 = vunpack.c.l.b16 %v669
          %v709 = vunpack.c.l.b16 %v670
          %v710 = vunpack.c.l.b16 %v671
          %v711 = vunpack.c.l.b16 %v672
          %v712 = vunpack.c.l.b16 %v673
          %v713 = vunpack.c.l.b16 %v674
          %v714 = vunpack.c.l.b16 %v675
          %v715 = vunpack.c.l.b16 %v676
          %v716 = vunpack.c.l.b16 %v677
          %v717 = vpack.c.b16 %v702, %v701
          %v718 = vpack.c.b16 %v704, %v703
          %v719 = vpack.c.b16 %v706, %v705
          %v720 = vpack.c.b16 %v708, %v707
          %v721 = vpack.c.b16 %v710, %v709
          %v722 = vpack.c.b16 %v712, %v711
          %v723 = vpack.c.b16 %v714, %v713
          %v724 = vpack.c.b16 %v716, %v715
          %733 = vmatprep.subr.bf16.mxu0 0
          %734 = vmatpush1.bf16.msra.mxu0 %v717
          %735 = vmatprep.subr.bf16.mxu0 0
          %736 = vmatpush1.bf16.msra.mxu0 %v718
          %737 = vmatprep.subr.bf16.mxu0 0
          %738 = vmatpush1.bf16.msra.mxu0 %v719
          %739 = vmatprep.subr.bf16.mxu0 0
          %740 = vmatpush1.bf16.msra.mxu0 %v720
          %741 = vmatprep.subr.bf16.mxu0 0
          %742 = vmatpush1.bf16.msra.mxu0 %v721
          %743 = vmatprep.subr.bf16.mxu0 0
          %744 = vmatpush1.bf16.msra.mxu0 %v722
          %745 = vmatprep.subr.bf16.mxu0 0
          %746 = vmatpush1.bf16.msra.mxu0 %v723
          %747 = vmatprep.subr.bf16.mxu0 0
          %748 = vmatpush1.bf16.msra.mxu0 %v724
          %749 = vmatprep.subr.bf16.mxu0 0
          %750 = vmatpush1.bf16.msra.mxu0 0
          %751 = vmatprep.subr.bf16.mxu0 0
          %752 = vmatpush1.bf16.msra.mxu0 0
          %753 = vmatprep.subr.bf16.mxu0 0
          %754 = vmatpush1.bf16.msra.mxu0 0
          %755 = vmatprep.subr.bf16.mxu0 0
          %756 = vmatpush1.bf16.msra.mxu0 0
          %757 = vmatprep.subr.bf16.mxu0 0
          %758 = vmatpush1.bf16.msra.mxu0 0
          %759 = vmatprep.subr.bf16.mxu0 0
          %760 = vmatpush1.bf16.msra.mxu0 0
          %761 = vmatprep.subr.bf16.mxu0 0
          %762 = vmatpush1.bf16.msra.mxu0 0
          %763 = vmatprep.subr.bf16.mxu0 0
          %764 = vmatpush1.bf16.msra.mxu0 0
          %765 = vmatprep.mubr.bf16.mxu0 0
          %766 = vmatmul.mubr.bf16.gmra.mrb[0].mxu0 %v654
          %v767 = vpop.f32.mrb[0].mxu0
          %v768 = vadd.f32 %v683, %v767
          %v769 = vpop.f32.mrb[0].mxu0
          %v770 = vpop.f32.mrb[0].mxu0
          %v771 = vadd.f32 %v683, %v770
          %v772 = vpop.f32.mrb[0].mxu0
          %773 = vmatprep.mubr.bf16.mxu0 0
          %774 = vmatmul.mubr.bf16.gmra.mrb[0].mxu0 %v655
          %v775 = vpop.f32.mrb[0].mxu0
          %v776 = vadd.f32 %v683, %v775
          %v777 = vpop.f32.mrb[0].mxu0
          %v778 = vpop.f32.mrb[0].mxu0
          %v779 = vadd.f32 %v683, %v778
          %v780 = vpop.f32.mrb[0].mxu0
          %781 = vmatprep.mubr.bf16.mxu0 0
          %782 = vmatmul.mubr.bf16.gmra.mrb[0].mxu0 %v656
          %v783 = vpop.f32.mrb[0].mxu0
          %v784 = vadd.f32 %v683, %v783
          %v785 = vpop.f32.mrb[0].mxu0
          %v786 = vpop.f32.mrb[0].mxu0
          %v787 = vadd.f32 %v683, %v786
          %v788 = vpop.f32.mrb[0].mxu0
          %789 = vmatprep.mubr.bf16.mxu0 0
          %790 = vmatmul.mubr.bf16.gmra.mrb[0].mxu0 %v657
          %v791 = vpop.f32.mrb[0].mxu0
          %v792 = vadd.f32 %v683, %v791
          %v793 = vpop.f32.mrb[0].mxu0
          %v794 = vpop.f32.mrb[0].mxu0
          %v795 = vadd.f32 %v683, %v794
          %v796 = vpop.f32.mrb[0].mxu0
          %797 = vmatprep.mubr.bf16.mxu0 0
          %798 = vmatmul.mubr.bf16.gmra.mrb[0].mxu0 %v658
          %v799 = vpop.f32.mrb[0].mxu0
          %v800 = vadd.f32 %v683, %v799
          %v801 = vpop.f32.mrb[0].mxu0
          %v802 = vpop.f32.mrb[0].mxu0
          %v803 = vadd.f32 %v683, %v802
          %v804 = vpop.f32.mrb[0].mxu0
          %805 = vmatprep.mubr.bf16.mxu0 0
          %806 = vmatmul.mubr.bf16.gmra.mrb[0].mxu0 %v659
          %v807 = vpop.f32.mrb[0].mxu0
          %v808 = vadd.f32 %v683, %v807
          %v809 = vpop.f32.mrb[0].mxu0
          %v810 = vpop.f32.mrb[0].mxu0
          %v811 = vadd.f32 %v683, %v810
          %v812 = vpop.f32.mrb[0].mxu0
          %813 = vmatprep.mubr.bf16.mxu0 0
          %814 = vmatmul.mubr.bf16.gmra.mrb[0].mxu0 %v660
          %v815 = vpop.f32.mrb[0].mxu0
          %v816 = vadd.f32 %v683, %v815
          %v817 = vpop.f32.mrb[0].mxu0
          %v818 = vpop.f32.mrb[0].mxu0
          %v819 = vadd.f32 %v683, %v818
          %v820 = vpop.f32.mrb[0].mxu0
          %821 = vmatprep.mubr.bf16.mxu0 0
          %822 = vmatmul.mubr.bf16.gmra.mrb[0].mxu0 %v661
          %v823 = vpop.f32.mrb[0].mxu0
          %v824 = vadd.f32 %v683, %v823
          %v825 = vpop.f32.mrb[0].mxu0
          %v826 = vpop.f32.mrb[0].mxu0
          %v827 = vadd.f32 %v683, %v826
          %v828 = vpop.f32.mrb[0].mxu0
          %829 = vdwg.mxu0
          %v830 = vpack.c.bf16 %v771, %v768
          %v831 = vpack.c.bf16 %v779, %v776
          %v832 = vpack.c.bf16 %v787, %v784
          %v833 = vpack.c.bf16 %v795, %v792
          %v834 = vpack.c.bf16 %v803, %v800
          %v835 = vpack.c.bf16 %v811, %v808
          %v836 = vpack.c.bf16 %v819, %v816
          %v837 = vpack.c.bf16 %v827, %v824
          %v846 = vunpack.c.l.b16 %v830
          %v847 = vunpack.c.h.b16 %v830
          %v848 = vunpack.c.l.b16 %v831
          %v849 = vunpack.c.h.b16 %v831
          %v850 = vunpack.c.l.b16 %v832
          %v851 = vunpack.c.h.b16 %v832
          %v852 = vunpack.c.l.b16 %v833
          %v853 = vunpack.c.h.b16 %v833
          %v854 = vunpack.c.l.b16 %v834
          %v855 = vunpack.c.h.b16 %v834
          %v856 = vunpack.c.l.b16 %v835
          %v857 = vunpack.c.h.b16 %v835
          %v858 = vunpack.c.l.b16 %v836
          %v859 = vunpack.c.h.b16 %v836
          %v860 = vunpack.c.l.b16 %v837
          %v861 = vunpack.c.h.b16 %v837
          %v862 = vpack.c.b16 %v846, %v846
          %v863 = vpack.c.b16 %v847, %v847
          %v864 = vpack.c.b16 %v848, %v848
          %v865 = vpack.c.b16 %v849, %v849
          %v866 = vpack.c.b16 %v850, %v850
          %v867 = vpack.c.b16 %v851, %v851
          %v868 = vpack.c.b16 %v852, %v852
          %v869 = vpack.c.b16 %v853, %v853
          %v870 = vpack.c.b16 %v854, %v854
          %v871 = vpack.c.b16 %v855, %v855
          %v872 = vpack.c.b16 %v856, %v856
          %v873 = vpack.c.b16 %v857, %v857
          %v874 = vpack.c.b16 %v858, %v858
          %v875 = vpack.c.b16 %v859, %v859
          %v876 = vpack.c.b16 %v860, %v860
          %v877 = vpack.c.b16 %v861, %v861
          %894 = vst [vmem:[%s338] sm:$0xf] %v862
          %895 = vst [vmem:[%s338 + $0x4] sm:$0xf] %v863
          %896 = vst [vmem:[%s338 + $0x8] sm:$0xf] %v864
          %897 = vst [vmem:[%s338 + $0xc] sm:$0xf] %v865
          %898 = vst [vmem:[%s338 + $0x10] sm:$0xf] %v866
          %899 = vst [vmem:[%s338 + $0x14] sm:$0xf] %v867
          %900 = vst [vmem:[%s338 + $0x18] sm:$0xf] %v868
          %901 = vst [vmem:[%s338 + $0x1c] sm:$0xf] %v869
          %902 = vst [vmem:[%s338 + $0x20] sm:$0xf] %v870
          %903 = vst [vmem:[%s338 + $0x24] sm:$0xf] %v871
          %904 = vst [vmem:[%s338 + $0x28] sm:$0xf] %v872
          %905 = vst [vmem:[%s338 + $0x2c] sm:$0xf] %v873
          %906 = vst [vmem:[%s338 + $0x30] sm:$0xf] %v874
          %907 = vst [vmem:[%s338 + $0x34] sm:$0xf] %v875
          %908 = vst [vmem:[%s338 + $0x38] sm:$0xf] %v876
          %909 = vst [vmem:[%s338 + $0x3c] sm:$0xf] %v877
        $region85: #{gcn2_forward.6} parent=72 // pred_fallthru
          _
        %s910 = smul.u32 16, %s19
        %p911 = scmp.lt.s32.totalorder %s910, 31
        %s912 = scalar_select %p911, %s910, 31
        %s913 = smul.addr %s912, 4
        %s914 = scalar_lea.vmem %s4, %s913
        // Predicated region
        $region86: #{gcn2_forward.6} parent=72 // pred_check
          %p915 = pneg %p141
        $region87: #{gcn2_forward.6} parent=72 // pred_check_branch
          %917 = sbr.rel (%p915) target = $region89
        $region88: #{gcn2_forward.6} parent=72 // pred_region
          %s918 = smul.u32 16, %s19
        $region89: #{gcn2_forward.6} parent=72 // pred_fallthru
          _
      $region73: #{gcn2_forward.6} parent=5 // pred_fallthru
        _
      %p919 = scmp.le.s32.totalorder 2, %s10
      // Predicated region
      $region90: #{gcn2_forward.6} parent=5 // pred_check
        %p920 = pneg %p919
      $region91: #{gcn2_forward.6} parent=5 // pred_check_branch
        %922 = sbr.rel (%p920) target = $region93
      $region92: #{gcn2_forward.6} parent=5 // pred_region
        %s923 = ssub.s32 %s10, 2
        // Predicated region
        $region94: #{gcn2_forward.6} parent=92 // pred_check
          %p924 = pneg %p147
        $region95: #{gcn2_forward.6} parent=92 // pred_check_branch
          %926 = sbr.rel (%p924) target = $region97
        $region96: #{gcn2_forward.6} parent=92 // pred_region
          %s927 = smul.u32 16, %s21
          %p928 = scmp.lt.s32.totalorder %s927, 31
          %s929 = scalar_select %p928, %s927, 31
          %s930 = smul.addr %s929, 4
          %s931 = scalar_lea.vmem %s4, %s930
        $region97: #{gcn2_forward.6} parent=92 // pred_fallthru
          _
      $region93: #{gcn2_forward.6} parent=5 // pred_fallthru
        _
    $region6: #{gcn2_forward.6} parent=1 // loop_footer
      %s14 = sadd.s32 1, %s10
    $region7: #{gcn2_forward.6} parent=1 // loop_footer_branch
      %9 = sbr.rel target = $region3
    $region8: #{gcn2_forward.6} parent=1 // loop_exit
      _

</llo_original>
